<compile_context>
chip_gen: v6e
topology: v6e:2x2x1
jax: 0.10.0
libtpu: 0.0.40
codegen_flags: <defaults>
</compile_context>

<pallas_src>
import functools

import jax
import jax.numpy as jnp
import numpy as np
from jax import lax
from jax.experimental import pallas as pl
from jax.experimental.pallas import tpu as pltpu

EPS = 1e-3                 # BatchNorm eps in the PyTorch module
_KSIZES = (3, 5, 7, 9)     # branch kernel sizes
_BASE_PADS = (0, 1, 2, 3)  # branch base paddings (module spec)
_MAXK = 9                  # all branches are embedded into a 9x9 tap grid


# ---------------------------------------------------------------------------
# Pallas kernel: fused 4-branch conv (K-folded taps) + folded BN + ReLU
# ---------------------------------------------------------------------------
def _fused_msb_kernel(x_ref, w_ref, b_ref, o_ref, *, wp, stride):
    """One (batch, output-row-block) grid step.

    x_ref : (1, 1, Cin, tile_l)   bf16  halo'd, zero-padded, H/W-flattened rows
    w_ref : (9, Cout, 9*Cin)      bf16  per-row weights, columns folded into K
                                        (BN scale already folded in)
    b_ref : (Cout, 1)             f32   folded BN bias
    o_ref : (1, 1, Cout, m_tile)  bf16  m_tile is a multiple of 128 lanes
    """
    cout, m_tile = o_ref.shape[2], o_ref.shape[3]
    acc = jnp.zeros((cout, m_tile), jnp.float32)        # register-carried acc
    # Static 9-step loop over kernel rows; the 9 column taps of each row are
    # stacked along the contraction dim -> one MXU dot per row, f32 accumulate.
    for dh in range(_MAXK):
        base = dh * wp
        if stride == 1:
            row = x_ref[0, 0, :, base:base + m_tile + _MAXK - 1]   # (Cin, M+8)
            parts = [row[:, dw:dw + m_tile] for dw in range(_MAXK)]
        else:
            # TODO(synk): stride > 1 strided-lane reads are untested on HW.
            parts = [x_ref[0, 0, :, pl.ds(base + dw, m_tile, stride=stride)]
                     for dw in range(_MAXK)]
        win = jnp.concatenate(parts, axis=0)                       # (9*Cin, M)
        acc = acc + jnp.dot(w_ref[dh], win,
                            preferred_element_type=jnp.float32)
    y = acc + b_ref[...]                    # folded BN bias (scale is in w)
    o_ref[0, 0] = jnp.maximum(y, 0.0).astype(o_ref.dtype)          # ReLU


# ---------------------------------------------------------------------------
# Fold the four branch weights / BN params into one (9, Cout, 9*Cin) tensor
# ---------------------------------------------------------------------------
def _fuse_branch_params(params, cin):
    cout = sum(int(p["w"].shape[-1]) for p in params)
    w_all = jnp.zeros((_MAXK, cout, _MAXK * cin), jnp.float32)
    bias = jnp.zeros((cout, 1), jnp.float32)
    c0 = 0
    for p, k in zip(params, _KSIZES):
        cb = int(p["w"].shape[-1])
        off = (_MAXK - k) // 2            # center kxk inside the 9x9 tap grid
        inv_std = p["gamma"] / jnp.sqrt(p["var"] + EPS)            # (cb,)
        # (kH, kW, Cin, cb) HWIO -> fold BN scale into out-chan -> (kH, cb, kW, Cin)
        wb = jnp.transpose(p["w"] * inv_std[None, None, None, :], (0, 3, 1, 2))
        for kh in range(k):
            blk = wb[kh].reshape(cb, k * cin)                      # (cb, kW*Cin)
            w_all = w_all.at[kh + off, c0:c0 + cb,
                             off * cin:(off + k) * cin].set(blk)
        bias = bias.at[c0:c0 + cb, 0].set(p["beta"] - p["mean"] * inv_std)
        c0 += cb
    return w_all.astype(jnp.bfloat16), bias


# ---------------------------------------------------------------------------
# MultiScaleBlock forward (NCHW in / NCHW out, like the PyTorch module)
# ---------------------------------------------------------------------------
@functools.partial(jax.jit, static_argnums=(2, 3, 4))
def multi_scale_block(x_nchw, params, stride, padding=0, m_tile_target=512):
    n, cin, h, w = x_nchw.shape
    pm = (_MAXK - 3) // 2 + padding              # = 3 + padding: shared max pad
    hp, wp = h + 2 * pm, w + 2 * pm
    ho = (hp - _MAXK) // stride + 1              # identical for all 4 branches
    wo = (wp - _MAXK) // stride + 1

    # Output-row tiling: second grid axis -> pipeline depth + megacore work
    # + bounded per-step VMEM; per-tile lane width rounded up to 128.
    row_tile = max(1, min(ho, m_tile_target // wp))
    n_rb = pl.cdiv(ho, row_tile)
    m_tile = pl.cdiv(row_tile * wp, 128) * 128
    tile_l = (_MAXK - 1) * wp + (_MAXK - 1) + stride * (m_tile - 1) + 1

    # Zero-pad: pm on each border + extra bottom rows so every tap window of
    # every tile (incl. the padded tail lanes / wrap columns) stays in bounds.
    l_needed = stride * (n_rb - 1) * row_tile * wp + tile_l
    extra_rows = max(0, -(-(l_needed - hp * wp) // wp))
    l_flat = (hp + extra_rows) * wp
    xp = jnp.pad(x_nchw, ((0, 0), (0, 0), (pm, pm + extra_rows), (pm, pm)))
    x_flat = xp.reshape(n, cin, l_flat).astype(jnp.bfloat16)   # NCHW-native

    # Halo-duplicated row blocks (8-row overlap) built with static slices so
    # every in-kernel ref access is static.
    starts = [stride * r * row_tile * wp for r in range(n_rb)]
    x_tiles = jnp.stack([x_flat[:, :, s:s + tile_l] for s in starts], axis=1)

    w_all, bias = _fuse_branch_params(params, cin)
    cout = w_all.shape[1]

    out = pl.pallas_call(
        functools.partial(_fused_msb_kernel, wp=wp, stride=stride),
        out_shape=jax.ShapeDtypeStruct((n, n_rb, cout, m_tile), jnp.bfloat16),
        grid=(n, n_rb),
        in_specs=[
            pl.BlockSpec((1, 1, cin, tile_l), lambda b, r: (b, r, 0, 0)),
            pl.BlockSpec((_MAXK, cout, _MAXK * cin), lambda b, r: (0, 0, 0)),
            pl.BlockSpec((cout, 1), lambda b, r: (0, 0)),
        ],
        out_specs=pl.BlockSpec((1, 1, cout, m_tile), lambda b, r: (b, r, 0, 0)),
        compiler_params=pltpu.CompilerParams(
            dimension_semantics=("parallel", "parallel")),
    )(x_tiles, w_all, bias)

    # (N, n_rb, Cout, m_tile): crop lane pad, stitch row blocks, drop the
    # wrap-around columns, cast to f32 (all fused into one XLA copy pass).
    out = out[..., :row_tile * wp].reshape(n, n_rb, cout, row_tile, wp)
    out = jnp.transpose(out, (0, 2, 1, 3, 4)).reshape(n, cout, n_rb * row_tile, wp)
    return out[:, :, :ho, :wo].astype(jnp.float32)


def init_params(key, in_channels, out_channels):
    branch_out = out_channels // 4
    params = []
    for k in _KSIZES:
        key, k1, k2, k3, k4, k5 = jax.random.split(key, 6)
        params.append(
            dict(
                w=jax.random.normal(k1, (k, k, in_channels, branch_out), jnp.float32) * 0.1,
                gamma=1.0 + 0.1 * jax.random.normal(k2, (branch_out,), jnp.float32),
                beta=0.1 * jax.random.normal(k3, (branch_out,), jnp.float32),
                mean=0.1 * jax.random.normal(k4, (branch_out,), jnp.float32),
                var=0.5 + 0.5 * jnp.abs(jax.random.normal(k5, (branch_out,), jnp.float32)),
            )
        )
    return params


# ---------------------------------------------------------------------------
# Pure-JAX reference (XLA conv, f32) for correctness checking
# ---------------------------------------------------------------------------
def reference(x_nchw, params, stride, padding=0):
    x = jnp.transpose(x_nchw, (0, 2, 3, 1))
    outs = []
    for p, k, bp in zip(params, _KSIZES, _BASE_PADS):
        pad = bp + padding
        conv = lax.conv_general_dilated(
            x, p["w"], (stride, stride), [(pad, pad), (pad, pad)],
            dimension_numbers=("NHWC", "HWIO", "NHWC"),
            precision=lax.Precision.HIGHEST,
        )
        inv_std = p["gamma"] / jnp.sqrt(p["var"] + EPS)
        outs.append(jnp.maximum(conv * inv_std + (p["beta"] - p["mean"] * inv_std), 0.0))
    return jnp.transpose(jnp.concatenate(outs, axis=-1), (0, 3, 1, 2))


if __name__ == "__main__":
    key = jax.random.PRNGKey(0)

    # Config 1: single row block per image (n_rb = 1).
    key, k_x, k_p = jax.random.split(key, 3)
    x1 = jax.random.normal(k_x, (2, 8, 16, 16), jnp.float32)
    p1 = init_params(k_p, 8, 16)
    out1 = jax.block_until_ready(multi_scale_block(x1, p1, 1, 0))
    ref1 = jax.block_until_ready(reference(x1, p1, 1, 0))
    assert out1.shape == ref1.shape, (out1.shape, ref1.shape)
    # bf16 MXU operands + bf16 store vs f32 HIGHEST reference -> looser tol.
    np.testing.assert_allclose(np.asarray(out1), np.asarray(ref1), rtol=2e-2, atol=5e-2)

    # Config 2: two row blocks (exercises the second grid axis) + extra padding.
    key, k_x, k_p = jax.random.split(key, 3)
    x2 = jax.random.normal(k_x, (1, 8, 24, 24), jnp.float32)
    p2 = init_params(k_p, 8, 8)
    out2 = jax.block_until_ready(multi_scale_block(x2, p2, 1, 1))
    ref2 = jax.block_until_ready(reference(x2, p2, 1, 1))
    assert out2.shape == ref2.shape, (out2.shape, ref2.shape)
    np.testing.assert_allclose(np.asarray(out2), np.asarray(ref2), rtol=2e-2, atol=5e-2)

    print("KERNEL_OK")
</pallas_src>

<mosaic_0001>
module attributes {stable_mosaic.version = 11 : i64} {
  func.func @_fused_msb_kernel(%arg0: i32, %arg1: i32, %arg2: memref<1x1x8x568xbf16, #tpu.memory_space<vmem>>, %arg3: memref<9x16x72xbf16, #tpu.memory_space<vmem>>, %arg4: memref<16x1xf32, #tpu.memory_space<vmem>>, %arg5: memref<1x1x16x384xbf16, #tpu.memory_space<vmem>>) attributes {dimension_semantics = [#tpu.dimension_semantics<parallel>, #tpu.dimension_semantics<parallel>], iteration_bounds = array<i64: 2, 1>, scalar_prefetch = 0 : i64, scratch_operands = 0 : i64, tpu.core_type = #tpu.core_type<tc>, window_params = [{transform_indices = @transform_0, window_bounds = array<i64: 1, 1, 8, 568>}, {pipeline_mode = #tpu.pipeline_mode<synchronous>, transform_indices = @transform_1, window_bounds = array<i64: 9, 16, 72>}, {pipeline_mode = #tpu.pipeline_mode<synchronous>, transform_indices = @transform_2, window_bounds = array<i64: 16, 1>}, {transform_indices = @transform_3, window_bounds = array<i64: 1, 1, 16, 384>}]} {
    %cst = arith.constant 0.000000e+00 : f32
    %0 = vector.broadcast %cst : f32 to vector<16x384xf32>
    %c0 = arith.constant 0 : index
    %c0_0 = arith.constant 0 : index
    %c0_1 = arith.constant 0 : index
    %c0_2 = arith.constant 0 : index
    %1 = vector.load %arg2[%c0, %c0_0, %c0_1, %c0_2] : memref<1x1x8x568xbf16, #tpu.memory_space<vmem>>, vector<1x1x8x392xbf16>
    %2 = vector.shape_cast %1 : vector<1x1x8x392xbf16> to vector<8x392xbf16>
    %3 = vector.extract_strided_slice %2 {offsets = [0, 0], sizes = [8, 384], strides = [1, 1]} : vector<8x392xbf16> to vector<8x384xbf16>
    %4 = vector.extract_strided_slice %2 {offsets = [0, 1], sizes = [8, 384], strides = [1, 1]} : vector<8x392xbf16> to vector<8x384xbf16>
    %5 = vector.extract_strided_slice %2 {offsets = [0, 2], sizes = [8, 384], strides = [1, 1]} : vector<8x392xbf16> to vector<8x384xbf16>
    %6 = vector.extract_strided_slice %2 {offsets = [0, 3], sizes = [8, 384], strides = [1, 1]} : vector<8x392xbf16> to vector<8x384xbf16>
    %7 = vector.extract_strided_slice %2 {offsets = [0, 4], sizes = [8, 384], strides = [1, 1]} : vector<8x392xbf16> to vector<8x384xbf16>
    %8 = vector.extract_strided_slice %2 {offsets = [0, 5], sizes = [8, 384], strides = [1, 1]} : vector<8x392xbf16> to vector<8x384xbf16>
    %9 = vector.extract_strided_slice %2 {offsets = [0, 6], sizes = [8, 384], strides = [1, 1]} : vector<8x392xbf16> to vector<8x384xbf16>
    %10 = vector.extract_strided_slice %2 {offsets = [0, 7], sizes = [8, 384], strides = [1, 1]} : vector<8x392xbf16> to vector<8x384xbf16>
    %11 = vector.extract_strided_slice %2 {offsets = [0, 8], sizes = [8, 384], strides = [1, 1]} : vector<8x392xbf16> to vector<8x384xbf16>
    %12 = tpu.concatenate %3, %4, %5, %6, %7, %8, %9, %10, %11 in 0 : vector<8x384xbf16>, vector<8x384xbf16>, vector<8x384xbf16>, vector<8x384xbf16>, vector<8x384xbf16>, vector<8x384xbf16>, vector<8x384xbf16>, vector<8x384xbf16>, vector<8x384xbf16> -> vector<72x384xbf16>
    %c0_3 = arith.constant 0 : index
    %c0_4 = arith.constant 0 : index
    %c0_5 = arith.constant 0 : index
    %13 = vector.load %arg3[%c0_3, %c0_4, %c0_5] : memref<9x16x72xbf16, #tpu.memory_space<vmem>>, vector<1x16x72xbf16>
    %14 = vector.shape_cast %13 : vector<1x16x72xbf16> to vector<16x72xbf16>
    %cst_6 = arith.constant dense<0.000000e+00> : vector<16x384xf32>
    %15 = tpu.matmul %14, %12, %cst_6 {dimension_numbers = #tpu.dot_dimension_numbers<[1], [0], [0], [1], [0, 0, 1, 1], [], []>} : vector<16x72xbf16>, vector<72x384xbf16>, vector<16x384xf32> -> vector<16x384xf32>
    %16 = arith.addf %0, %15 : vector<16x384xf32>
    %c0_7 = arith.constant 0 : index
    %c0_8 = arith.constant 0 : index
    %c0_9 = arith.constant 0 : index
    %c22 = arith.constant 22 : index
    %17 = vector.load %arg2[%c0_7, %c0_8, %c0_9, %c22] : memref<1x1x8x568xbf16, #tpu.memory_space<vmem>>, vector<1x1x8x392xbf16>
    %18 = vector.shape_cast %17 : vector<1x1x8x392xbf16> to vector<8x392xbf16>
    %19 = vector.extract_strided_slice %18 {offsets = [0, 0], sizes = [8, 384], strides = [1, 1]} : vector<8x392xbf16> to vector<8x384xbf16>
    %20 = vector.extract_strided_slice %18 {offsets = [0, 1], sizes = [8, 384], strides = [1, 1]} : vector<8x392xbf16> to vector<8x384xbf16>
    %21 = vector.extract_strided_slice %18 {offsets = [0, 2], sizes = [8, 384], strides = [1, 1]} : vector<8x392xbf16> to vector<8x384xbf16>
    %22 = vector.extract_strided_slice %18 {offsets = [0, 3], sizes = [8, 384], strides = [1, 1]} : vector<8x392xbf16> to vector<8x384xbf16>
    %23 = vector.extract_strided_slice %18 {offsets = [0, 4], sizes = [8, 384], strides = [1, 1]} : vector<8x392xbf16> to vector<8x384xbf16>
    %24 = vector.extract_strided_slice %18 {offsets = [0, 5], sizes = [8, 384], strides = [1, 1]} : vector<8x392xbf16> to vector<8x384xbf16>
    %25 = vector.extract_strided_slice %18 {offsets = [0, 6], sizes = [8, 384], strides = [1, 1]} : vector<8x392xbf16> to vector<8x384xbf16>
    %26 = vector.extract_strided_slice %18 {offsets = [0, 7], sizes = [8, 384], strides = [1, 1]} : vector<8x392xbf16> to vector<8x384xbf16>
    %27 = vector.extract_strided_slice %18 {offsets = [0, 8], sizes = [8, 384], strides = [1, 1]} : vector<8x392xbf16> to vector<8x384xbf16>
    %28 = tpu.concatenate %19, %20, %21, %22, %23, %24, %25, %26, %27 in 0 : vector<8x384xbf16>, vector<8x384xbf16>, vector<8x384xbf16>, vector<8x384xbf16>, vector<8x384xbf16>, vector<8x384xbf16>, vector<8x384xbf16>, vector<8x384xbf16>, vector<8x384xbf16> -> vector<72x384xbf16>
    %c1 = arith.constant 1 : index
    %c0_10 = arith.constant 0 : index
    %c0_11 = arith.constant 0 : index
    %29 = vector.load %arg3[%c1, %c0_10, %c0_11] : memref<9x16x72xbf16, #tpu.memory_space<vmem>>, vector<1x16x72xbf16>
    %30 = vector.shape_cast %29 : vector<1x16x72xbf16> to vector<16x72xbf16>
    %cst_12 = arith.constant dense<0.000000e+00> : vector<16x384xf32>
    %31 = tpu.matmul %30, %28, %cst_12 {dimension_numbers = #tpu.dot_dimension_numbers<[1], [0], [0], [1], [0, 0, 1, 1], [], []>} : vector<16x72xbf16>, vector<72x384xbf16>, vector<16x384xf32> -> vector<16x384xf32>
    %32 = arith.addf %16, %31 : vector<16x384xf32>
    %c0_13 = arith.constant 0 : index
    %c0_14 = arith.constant 0 : index
    %c0_15 = arith.constant 0 : index
    %c44 = arith.constant 44 : index
    %33 = vector.load %arg2[%c0_13, %c0_14, %c0_15, %c44] : memref<1x1x8x568xbf16, #tpu.memory_space<vmem>>, vector<1x1x8x392xbf16>
    %34 = vector.shape_cast %33 : vector<1x1x8x392xbf16> to vector<8x392xbf16>
    %35 = vector.extract_strided_slice %34 {offsets = [0, 0], sizes = [8, 384], strides = [1, 1]} : vector<8x392xbf16> to vector<8x384xbf16>
    %36 = vector.extract_strided_slice %34 {offsets = [0, 1], sizes = [8, 384], strides = [1, 1]} : vector<8x392xbf16> to vector<8x384xbf16>
    %37 = vector.extract_strided_slice %34 {offsets = [0, 2], sizes = [8, 384], strides = [1, 1]} : vector<8x392xbf16> to vector<8x384xbf16>
    %38 = vector.extract_strided_slice %34 {offsets = [0, 3], sizes = [8, 384], strides = [1, 1]} : vector<8x392xbf16> to vector<8x384xbf16>
    %39 = vector.extract_strided_slice %34 {offsets = [0, 4], sizes = [8, 384], strides = [1, 1]} : vector<8x392xbf16> to vector<8x384xbf16>
    %40 = vector.extract_strided_slice %34 {offsets = [0, 5], sizes = [8, 384], strides = [1, 1]} : vector<8x392xbf16> to vector<8x384xbf16>
    %41 = vector.extract_strided_slice %34 {offsets = [0, 6], sizes = [8, 384], strides = [1, 1]} : vector<8x392xbf16> to vector<8x384xbf16>
    %42 = vector.extract_strided_slice %34 {offsets = [0, 7], sizes = [8, 384], strides = [1, 1]} : vector<8x392xbf16> to vector<8x384xbf16>
    %43 = vector.extract_strided_slice %34 {offsets = [0, 8], sizes = [8, 384], strides = [1, 1]} : vector<8x392xbf16> to vector<8x384xbf16>
    %44 = tpu.concatenate %35, %36, %37, %38, %39, %40, %41, %42, %43 in 0 : vector<8x384xbf16>, vector<8x384xbf16>, vector<8x384xbf16>, vector<8x384xbf16>, vector<8x384xbf16>, vector<8x384xbf16>, vector<8x384xbf16>, vector<8x384xbf16>, vector<8x384xbf16> -> vector<72x384xbf16>
    %c2 = arith.constant 2 : index
    %c0_16 = arith.constant 0 : index
    %c0_17 = arith.constant 0 : index
    %45 = vector.load %arg3[%c2, %c0_16, %c0_17] : memref<9x16x72xbf16, #tpu.memory_space<vmem>>, vector<1x16x72xbf16>
    %46 = vector.shape_cast %45 : vector<1x16x72xbf16> to vector<16x72xbf16>
    %cst_18 = arith.constant dense<0.000000e+00> : vector<16x384xf32>
    %47 = tpu.matmul %46, %44, %cst_18 {dimension_numbers = #tpu.dot_dimension_numbers<[1], [0], [0], [1], [0, 0, 1, 1], [], []>} : vector<16x72xbf16>, vector<72x384xbf16>, vector<16x384xf32> -> vector<16x384xf32>
    %48 = arith.addf %32, %47 : vector<16x384xf32>
    %c0_19 = arith.constant 0 : index
    %c0_20 = arith.constant 0 : index
    %c0_21 = arith.constant 0 : index
    %c66 = arith.constant 66 : index
    %49 = vector.load %arg2[%c0_19, %c0_20, %c0_21, %c66] : memref<1x1x8x568xbf16, #tpu.memory_space<vmem>>, vector<1x1x8x392xbf16>
    %50 = vector.shape_cast %49 : vector<1x1x8x392xbf16> to vector<8x392xbf16>
    %51 = vector.extract_strided_slice %50 {offsets = [0, 0], sizes = [8, 384], strides = [1, 1]} : vector<8x392xbf16> to vector<8x384xbf16>
    %52 = vector.extract_strided_slice %50 {offsets = [0, 1], sizes = [8, 384], strides = [1, 1]} : vector<8x392xbf16> to vector<8x384xbf16>
    %53 = vector.extract_strided_slice %50 {offsets = [0, 2], sizes = [8, 384], strides = [1, 1]} : vector<8x392xbf16> to vector<8x384xbf16>
    %54 = vector.extract_strided_slice %50 {offsets = [0, 3], sizes = [8, 384], strides = [1, 1]} : vector<8x392xbf16> to vector<8x384xbf16>
    %55 = vector.extract_strided_slice %50 {offsets = [0, 4], sizes = [8, 384], strides = [1, 1]} : vector<8x392xbf16> to vector<8x384xbf16>
    %56 = vector.extract_strided_slice %50 {offsets = [0, 5], sizes = [8, 384], strides = [1, 1]} : vector<8x392xbf16> to vector<8x384xbf16>
    %57 = vector.extract_strided_slice %50 {offsets = [0, 6], sizes = [8, 384], strides = [1, 1]} : vector<8x392xbf16> to vector<8x384xbf16>
    %58 = vector.extract_strided_slice %50 {offsets = [0, 7], sizes = [8, 384], strides = [1, 1]} : vector<8x392xbf16> to vector<8x384xbf16>
    %59 = vector.extract_strided_slice %50 {offsets = [0, 8], sizes = [8, 384], strides = [1, 1]} : vector<8x392xbf16> to vector<8x384xbf16>
    %60 = tpu.concatenate %51, %52, %53, %54, %55, %56, %57, %58, %59 in 0 : vector<8x384xbf16>, vector<8x384xbf16>, vector<8x384xbf16>, vector<8x384xbf16>, vector<8x384xbf16>, vector<8x384xbf16>, vector<8x384xbf16>, vector<8x384xbf16>, vector<8x384xbf16> -> vector<72x384xbf16>
    %c3 = arith.constant 3 : index
    %c0_22 = arith.constant 0 : index
    %c0_23 = arith.constant 0 : index
    %61 = vector.load %arg3[%c3, %c0_22, %c0_23] : memref<9x16x72xbf16, #tpu.memory_space<vmem>>, vector<1x16x72xbf16>
    %62 = vector.shape_cast %61 : vector<1x16x72xbf16> to vector<16x72xbf16>
    %cst_24 = arith.constant dense<0.000000e+00> : vector<16x384xf32>
    %63 = tpu.matmul %62, %60, %cst_24 {dimension_numbers = #tpu.dot_dimension_numbers<[1], [0], [0], [1], [0, 0, 1, 1], [], []>} : vector<16x72xbf16>, vector<72x384xbf16>, vector<16x384xf32> -> vector<16x384xf32>
    %64 = arith.addf %48, %63 : vector<16x384xf32>
    %c0_25 = arith.constant 0 : index
    %c0_26 = arith.constant 0 : index
    %c0_27 = arith.constant 0 : index
    %c88 = arith.constant 88 : index
    %65 = vector.load %arg2[%c0_25, %c0_26, %c0_27, %c88] : memref<1x1x8x568xbf16, #tpu.memory_space<vmem>>, vector<1x1x8x392xbf16>
    %66 = vector.shape_cast %65 : vector<1x1x8x392xbf16> to vector<8x392xbf16>
    %67 = vector.extract_strided_slice %66 {offsets = [0, 0], sizes = [8, 384], strides = [1, 1]} : vector<8x392xbf16> to vector<8x384xbf16>
    %68 = vector.extract_strided_slice %66 {offsets = [0, 1], sizes = [8, 384], strides = [1, 1]} : vector<8x392xbf16> to vector<8x384xbf16>
    %69 = vector.extract_strided_slice %66 {offsets = [0, 2], sizes = [8, 384], strides = [1, 1]} : vector<8x392xbf16> to vector<8x384xbf16>
    %70 = vector.extract_strided_slice %66 {offsets = [0, 3], sizes = [8, 384], strides = [1, 1]} : vector<8x392xbf16> to vector<8x384xbf16>
    %71 = vector.extract_strided_slice %66 {offsets = [0, 4], sizes = [8, 384], strides = [1, 1]} : vector<8x392xbf16> to vector<8x384xbf16>
    %72 = vector.extract_strided_slice %66 {offsets = [0, 5], sizes = [8, 384], strides = [1, 1]} : vector<8x392xbf16> to vector<8x384xbf16>
    %73 = vector.extract_strided_slice %66 {offsets = [0, 6], sizes = [8, 384], strides = [1, 1]} : vector<8x392xbf16> to vector<8x384xbf16>
    %74 = vector.extract_strided_slice %66 {offsets = [0, 7], sizes = [8, 384], strides = [1, 1]} : vector<8x392xbf16> to vector<8x384xbf16>
    %75 = vector.extract_strided_slice %66 {offsets = [0, 8], sizes = [8, 384], strides = [1, 1]} : vector<8x392xbf16> to vector<8x384xbf16>
    %76 = tpu.concatenate %67, %68, %69, %70, %71, %72, %73, %74, %75 in 0 : vector<8x384xbf16>, vector<8x384xbf16>, vector<8x384xbf16>, vector<8x384xbf16>, vector<8x384xbf16>, vector<8x384xbf16>, vector<8x384xbf16>, vector<8x384xbf16>, vector<8x384xbf16> -> vector<72x384xbf16>
    %c4 = arith.constant 4 : index
    %c0_28 = arith.constant 0 : index
    %c0_29 = arith.constant 0 : index
    %77 = vector.load %arg3[%c4, %c0_28, %c0_29] : memref<9x16x72xbf16, #tpu.memory_space<vmem>>, vector<1x16x72xbf16>
    %78 = vector.shape_cast %77 : vector<1x16x72xbf16> to vector<16x72xbf16>
    %cst_30 = arith.constant dense<0.000000e+00> : vector<16x384xf32>
    %79 = tpu.matmul %78, %76, %cst_30 {dimension_numbers = #tpu.dot_dimension_numbers<[1], [0], [0], [1], [0, 0, 1, 1], [], []>} : vector<16x72xbf16>, vector<72x384xbf16>, vector<16x384xf32> -> vector<16x384xf32>
    %80 = arith.addf %64, %79 : vector<16x384xf32>
    %c0_31 = arith.constant 0 : index
    %c0_32 = arith.constant 0 : index
    %c0_33 = arith.constant 0 : index
    %c110 = arith.constant 110 : index
    %81 = vector.load %arg2[%c0_31, %c0_32, %c0_33, %c110] : memref<1x1x8x568xbf16, #tpu.memory_space<vmem>>, vector<1x1x8x392xbf16>
    %82 = vector.shape_cast %81 : vector<1x1x8x392xbf16> to vector<8x392xbf16>
    %83 = vector.extract_strided_slice %82 {offsets = [0, 0], sizes = [8, 384], strides = [1, 1]} : vector<8x392xbf16> to vector<8x384xbf16>
    %84 = vector.extract_strided_slice %82 {offsets = [0, 1], sizes = [8, 384], strides = [1, 1]} : vector<8x392xbf16> to vector<8x384xbf16>
    %85 = vector.extract_strided_slice %82 {offsets = [0, 2], sizes = [8, 384], strides = [1, 1]} : vector<8x392xbf16> to vector<8x384xbf16>
    %86 = vector.extract_strided_slice %82 {offsets = [0, 3], sizes = [8, 384], strides = [1, 1]} : vector<8x392xbf16> to vector<8x384xbf16>
    %87 = vector.extract_strided_slice %82 {offsets = [0, 4], sizes = [8, 384], strides = [1, 1]} : vector<8x392xbf16> to vector<8x384xbf16>
    %88 = vector.extract_strided_slice %82 {offsets = [0, 5], sizes = [8, 384], strides = [1, 1]} : vector<8x392xbf16> to vector<8x384xbf16>
    %89 = vector.extract_strided_slice %82 {offsets = [0, 6], sizes = [8, 384], strides = [1, 1]} : vector<8x392xbf16> to vector<8x384xbf16>
    %90 = vector.extract_strided_slice %82 {offsets = [0, 7], sizes = [8, 384], strides = [1, 1]} : vector<8x392xbf16> to vector<8x384xbf16>
    %91 = vector.extract_strided_slice %82 {offsets = [0, 8], sizes = [8, 384], strides = [1, 1]} : vector<8x392xbf16> to vector<8x384xbf16>
    %92 = tpu.concatenate %83, %84, %85, %86, %87, %88, %89, %90, %91 in 0 : vector<8x384xbf16>, vector<8x384xbf16>, vector<8x384xbf16>, vector<8x384xbf16>, vector<8x384xbf16>, vector<8x384xbf16>, vector<8x384xbf16>, vector<8x384xbf16>, vector<8x384xbf16> -> vector<72x384xbf16>
    %c5 = arith.constant 5 : index
    %c0_34 = arith.constant 0 : index
    %c0_35 = arith.constant 0 : index
    %93 = vector.load %arg3[%c5, %c0_34, %c0_35] : memref<9x16x72xbf16, #tpu.memory_space<vmem>>, vector<1x16x72xbf16>
    %94 = vector.shape_cast %93 : vector<1x16x72xbf16> to vector<16x72xbf16>
    %cst_36 = arith.constant dense<0.000000e+00> : vector<16x384xf32>
    %95 = tpu.matmul %94, %92, %cst_36 {dimension_numbers = #tpu.dot_dimension_numbers<[1], [0], [0], [1], [0, 0, 1, 1], [], []>} : vector<16x72xbf16>, vector<72x384xbf16>, vector<16x384xf32> -> vector<16x384xf32>
    %96 = arith.addf %80, %95 : vector<16x384xf32>
    %c0_37 = arith.constant 0 : index
    %c0_38 = arith.constant 0 : index
    %c0_39 = arith.constant 0 : index
    %c132 = arith.constant 132 : index
    %97 = vector.load %arg2[%c0_37, %c0_38, %c0_39, %c132] : memref<1x1x8x568xbf16, #tpu.memory_space<vmem>>, vector<1x1x8x392xbf16>
    %98 = vector.shape_cast %97 : vector<1x1x8x392xbf16> to vector<8x392xbf16>
    %99 = vector.extract_strided_slice %98 {offsets = [0, 0], sizes = [8, 384], strides = [1, 1]} : vector<8x392xbf16> to vector<8x384xbf16>
    %100 = vector.extract_strided_slice %98 {offsets = [0, 1], sizes = [8, 384], strides = [1, 1]} : vector<8x392xbf16> to vector<8x384xbf16>
    %101 = vector.extract_strided_slice %98 {offsets = [0, 2], sizes = [8, 384], strides = [1, 1]} : vector<8x392xbf16> to vector<8x384xbf16>
    %102 = vector.extract_strided_slice %98 {offsets = [0, 3], sizes = [8, 384], strides = [1, 1]} : vector<8x392xbf16> to vector<8x384xbf16>
    %103 = vector.extract_strided_slice %98 {offsets = [0, 4], sizes = [8, 384], strides = [1, 1]} : vector<8x392xbf16> to vector<8x384xbf16>
    %104 = vector.extract_strided_slice %98 {offsets = [0, 5], sizes = [8, 384], strides = [1, 1]} : vector<8x392xbf16> to vector<8x384xbf16>
    %105 = vector.extract_strided_slice %98 {offsets = [0, 6], sizes = [8, 384], strides = [1, 1]} : vector<8x392xbf16> to vector<8x384xbf16>
    %106 = vector.extract_strided_slice %98 {offsets = [0, 7], sizes = [8, 384], strides = [1, 1]} : vector<8x392xbf16> to vector<8x384xbf16>
    %107 = vector.extract_strided_slice %98 {offsets = [0, 8], sizes = [8, 384], strides = [1, 1]} : vector<8x392xbf16> to vector<8x384xbf16>
    %108 = tpu.concatenate %99, %100, %101, %102, %103, %104, %105, %106, %107 in 0 : vector<8x384xbf16>, vector<8x384xbf16>, vector<8x384xbf16>, vector<8x384xbf16>, vector<8x384xbf16>, vector<8x384xbf16>, vector<8x384xbf16>, vector<8x384xbf16>, vector<8x384xbf16> -> vector<72x384xbf16>
    %c6 = arith.constant 6 : index
    %c0_40 = arith.constant 0 : index
    %c0_41 = arith.constant 0 : index
    %109 = vector.load %arg3[%c6, %c0_40, %c0_41] : memref<9x16x72xbf16, #tpu.memory_space<vmem>>, vector<1x16x72xbf16>
    %110 = vector.shape_cast %109 : vector<1x16x72xbf16> to vector<16x72xbf16>
    %cst_42 = arith.constant dense<0.000000e+00> : vector<16x384xf32>
    %111 = tpu.matmul %110, %108, %cst_42 {dimension_numbers = #tpu.dot_dimension_numbers<[1], [0], [0], [1], [0, 0, 1, 1], [], []>} : vector<16x72xbf16>, vector<72x384xbf16>, vector<16x384xf32> -> vector<16x384xf32>
    %112 = arith.addf %96, %111 : vector<16x384xf32>
    %c0_43 = arith.constant 0 : index
    %c0_44 = arith.constant 0 : index
    %c0_45 = arith.constant 0 : index
    %c154 = arith.constant 154 : index
    %113 = vector.load %arg2[%c0_43, %c0_44, %c0_45, %c154] : memref<1x1x8x568xbf16, #tpu.memory_space<vmem>>, vector<1x1x8x392xbf16>
    %114 = vector.shape_cast %113 : vector<1x1x8x392xbf16> to vector<8x392xbf16>
    %115 = vector.extract_strided_slice %114 {offsets = [0, 0], sizes = [8, 384], strides = [1, 1]} : vector<8x392xbf16> to vector<8x384xbf16>
    %116 = vector.extract_strided_slice %114 {offsets = [0, 1], sizes = [8, 384], strides = [1, 1]} : vector<8x392xbf16> to vector<8x384xbf16>
    %117 = vector.extract_strided_slice %114 {offsets = [0, 2], sizes = [8, 384], strides = [1, 1]} : vector<8x392xbf16> to vector<8x384xbf16>
    %118 = vector.extract_strided_slice %114 {offsets = [0, 3], sizes = [8, 384], strides = [1, 1]} : vector<8x392xbf16> to vector<8x384xbf16>
    %119 = vector.extract_strided_slice %114 {offsets = [0, 4], sizes = [8, 384], strides = [1, 1]} : vector<8x392xbf16> to vector<8x384xbf16>
    %120 = vector.extract_strided_slice %114 {offsets = [0, 5], sizes = [8, 384], strides = [1, 1]} : vector<8x392xbf16> to vector<8x384xbf16>
    %121 = vector.extract_strided_slice %114 {offsets = [0, 6], sizes = [8, 384], strides = [1, 1]} : vector<8x392xbf16> to vector<8x384xbf16>
    %122 = vector.extract_strided_slice %114 {offsets = [0, 7], sizes = [8, 384], strides = [1, 1]} : vector<8x392xbf16> to vector<8x384xbf16>
    %123 = vector.extract_strided_slice %114 {offsets = [0, 8], sizes = [8, 384], strides = [1, 1]} : vector<8x392xbf16> to vector<8x384xbf16>
    %124 = tpu.concatenate %115, %116, %117, %118, %119, %120, %121, %122, %123 in 0 : vector<8x384xbf16>, vector<8x384xbf16>, vector<8x384xbf16>, vector<8x384xbf16>, vector<8x384xbf16>, vector<8x384xbf16>, vector<8x384xbf16>, vector<8x384xbf16>, vector<8x384xbf16> -> vector<72x384xbf16>
    %c7 = arith.constant 7 : index
    %c0_46 = arith.constant 0 : index
    %c0_47 = arith.constant 0 : index
    %125 = vector.load %arg3[%c7, %c0_46, %c0_47] : memref<9x16x72xbf16, #tpu.memory_space<vmem>>, vector<1x16x72xbf16>
    %126 = vector.shape_cast %125 : vector<1x16x72xbf16> to vector<16x72xbf16>
    %cst_48 = arith.constant dense<0.000000e+00> : vector<16x384xf32>
    %127 = tpu.matmul %126, %124, %cst_48 {dimension_numbers = #tpu.dot_dimension_numbers<[1], [0], [0], [1], [0, 0, 1, 1], [], []>} : vector<16x72xbf16>, vector<72x384xbf16>, vector<16x384xf32> -> vector<16x384xf32>
    %128 = arith.addf %112, %127 : vector<16x384xf32>
    %c0_49 = arith.constant 0 : index
    %c0_50 = arith.constant 0 : index
    %c0_51 = arith.constant 0 : index
    %c176 = arith.constant 176 : index
    %129 = vector.load %arg2[%c0_49, %c0_50, %c0_51, %c176] : memref<1x1x8x568xbf16, #tpu.memory_space<vmem>>, vector<1x1x8x392xbf16>
    %130 = vector.shape_cast %129 : vector<1x1x8x392xbf16> to vector<8x392xbf16>
    %131 = vector.extract_strided_slice %130 {offsets = [0, 0], sizes = [8, 384], strides = [1, 1]} : vector<8x392xbf16> to vector<8x384xbf16>
    %132 = vector.extract_strided_slice %130 {offsets = [0, 1], sizes = [8, 384], strides = [1, 1]} : vector<8x392xbf16> to vector<8x384xbf16>
    %133 = vector.extract_strided_slice %130 {offsets = [0, 2], sizes = [8, 384], strides = [1, 1]} : vector<8x392xbf16> to vector<8x384xbf16>
    %134 = vector.extract_strided_slice %130 {offsets = [0, 3], sizes = [8, 384], strides = [1, 1]} : vector<8x392xbf16> to vector<8x384xbf16>
    %135 = vector.extract_strided_slice %130 {offsets = [0, 4], sizes = [8, 384], strides = [1, 1]} : vector<8x392xbf16> to vector<8x384xbf16>
    %136 = vector.extract_strided_slice %130 {offsets = [0, 5], sizes = [8, 384], strides = [1, 1]} : vector<8x392xbf16> to vector<8x384xbf16>
    %137 = vector.extract_strided_slice %130 {offsets = [0, 6], sizes = [8, 384], strides = [1, 1]} : vector<8x392xbf16> to vector<8x384xbf16>
    %138 = vector.extract_strided_slice %130 {offsets = [0, 7], sizes = [8, 384], strides = [1, 1]} : vector<8x392xbf16> to vector<8x384xbf16>
    %139 = vector.extract_strided_slice %130 {offsets = [0, 8], sizes = [8, 384], strides = [1, 1]} : vector<8x392xbf16> to vector<8x384xbf16>
    %140 = tpu.concatenate %131, %132, %133, %134, %135, %136, %137, %138, %139 in 0 : vector<8x384xbf16>, vector<8x384xbf16>, vector<8x384xbf16>, vector<8x384xbf16>, vector<8x384xbf16>, vector<8x384xbf16>, vector<8x384xbf16>, vector<8x384xbf16>, vector<8x384xbf16> -> vector<72x384xbf16>
    %c8 = arith.constant 8 : index
    %c0_52 = arith.constant 0 : index
    %c0_53 = arith.constant 0 : index
    %141 = vector.load %arg3[%c8, %c0_52, %c0_53] : memref<9x16x72xbf16, #tpu.memory_space<vmem>>, vector<1x16x72xbf16>
    %142 = vector.shape_cast %141 : vector<1x16x72xbf16> to vector<16x72xbf16>
    %cst_54 = arith.constant dense<0.000000e+00> : vector<16x384xf32>
    %143 = tpu.matmul %142, %140, %cst_54 {dimension_numbers = #tpu.dot_dimension_numbers<[1], [0], [0], [1], [0, 0, 1, 1], [], []>} : vector<16x72xbf16>, vector<72x384xbf16>, vector<16x384xf32> -> vector<16x384xf32>
    %144 = arith.addf %128, %143 : vector<16x384xf32>
    %c0_55 = arith.constant 0 : index
    %c0_56 = arith.constant 0 : index
    %145 = vector.load %arg4[%c0_55, %c0_56] : memref<16x1xf32, #tpu.memory_space<vmem>>, vector<16x1xf32>
    %146 = vector.broadcast %145 : vector<16x1xf32> to vector<16x384xf32>
    %147 = arith.addf %144, %146 : vector<16x384xf32>
    %cst_57 = arith.constant 0.000000e+00 : f32
    %148 = vector.broadcast %cst_57 : f32 to vector<16x384xf32>
    %149 = arith.maximumf %147, %148 : vector<16x384xf32>
    %150 = arith.truncf %149 : vector<16x384xf32> to vector<16x384xbf16>
    %c0_58 = arith.constant 0 : index
    %c0_59 = arith.constant 0 : index
    %c0_60 = arith.constant 0 : index
    %c0_61 = arith.constant 0 : index
    %151 = vector.load %arg5[%c0_58, %c0_59, %c0_60, %c0_61] : memref<1x1x16x384xbf16, #tpu.memory_space<vmem>>, vector<1x1x16x384xbf16>
    %152 = vector.shape_cast %151 : vector<1x1x16x384xbf16> to vector<16x384xbf16>
    %153 = vector.shape_cast %150 : vector<16x384xbf16> to vector<1x1x16x384xbf16>
    tpu.vector_store %arg5[%c0_58, %c0_59, %c0_60, %c0_61], %153 {strides = array<i32>} : memref<1x1x16x384xbf16, #tpu.memory_space<vmem>>, vector<1x1x16x384xbf16>,
    return
  }
  func.func @transform_0(%arg0: i32, %arg1: i32) -> (i32, i32, i32, i32) {
    %c0_i32 = arith.constant 0 : i32
    %c0_i32_0 = arith.constant 0 : i32
    %c0_i32_1 = arith.constant 0 : i32
    return %arg0, %arg1, %c0_i32, %c0_i32_0 : i32, i32, i32, i32
  }
  func.func @transform_1(%arg0: i32, %arg1: i32) -> (i32, i32, i32) {
    %c0_i32 = arith.constant 0 : i32
    %c0_i32_0 = arith.constant 0 : i32
    %c0_i32_1 = arith.constant 0 : i32
    %c0_i32_2 = arith.constant 0 : i32
    return %c0_i32, %c0_i32_0, %c0_i32_1 : i32, i32, i32
  }
  func.func @transform_2(%arg0: i32, %arg1: i32) -> (i32, i32) {
    %c0_i32 = arith.constant 0 : i32
    %c0_i32_0 = arith.constant 0 : i32
    %c0_i32_1 = arith.constant 0 : i32
    return %c0_i32, %c0_i32_0 : i32, i32
  }
  func.func @transform_3(%arg0: i32, %arg1: i32) -> (i32, i32, i32, i32) {
    %c0_i32 = arith.constant 0 : i32
    %c0_i32_0 = arith.constant 0 : i32
    %c0_i32_1 = arith.constant 0 : i32
    return %arg0, %arg1, %c0_i32, %c0_i32_0 : i32, i32, i32, i32
  }
}

</mosaic_0001>

<llo_original>
// kernel: multi_scale_block.1
$region0: #{multi_scale_block.1}
  #allocation0 [shape = 'u32[]', space=smem, size = 0x4, offset = 0x4, fixed_abs, tag = 'smem constant byte address 0x4 - core index']
  #allocation1 [shape = 'u32[144,128]{1,0:T(1,128)}', space=vmem, size = 0x12000, scoped, tag = 'internal scratch']
  %s0 = inlined_call_operand.vmem [shape: bf16[2,1,8,568], index: 0, kind: input, shape index: {}]
  %s1 = inlined_call_operand.vmem [shape: bf16[9,16,72], index: 1, kind: input, shape index: {}]
  %s2 = inlined_call_operand.vmem [shape: f32[16,1], index: 2, kind: input, shape index: {}]
  %s3 = inlined_call_operand.vmem [shape: bf16[2,1,16,384], index: 3, kind: output, shape index: {}]
  %s4 = sld [smem:[#allocation0]]
  $region45: #{multi_scale_block.1} parent=0
    _
  %s6 = ssub.s32 1, %s4
  %s7 = scalar_select 0, %s6, %s4
  loop: start=0, step=1, limit=4
  $region2: #{multi_scale_block.1} parent=0 // loop_pre_header
    _
  $region3: #{multi_scale_block.1} parent=0 // loop_header
    %s9 = sphi 0, %s13
    %p10 = scmp.ge.s32.totalorder %s9, 4
    %s16 = sphi 0, %s28
    %s17 = sphi 0, %s24
    %s18 = sphi 0, %s16
    %s19 = sphi 0, %s17
    %s20 = sphi 0, %s18
    %s21 = sphi 0, %s19
    %s33 = sphi 0, %s35
    %s36 = sphi 0, %s33
    %s37 = sphi 0, %s36
    %s53 = sphi 0, %s37
    %s57 = sphi 0, %s57
    %s59 = sphi 0, %s57
    %s60 = sphi 0, %s59
    %s74 = sphi 0, %s60
    %s78 = sphi 0, %s78
    %s80 = sphi 0, %s78
    %s81 = sphi 0, %s80
    %s95 = sphi 0, %s81
    %s103 = sphi 0, %s105
    %s106 = sphi 0, %s103
    %s107 = sphi 0, %s106
    %s123 = sphi 0, %s107
  $region4: #{multi_scale_block.1} parent=0 // loop_header_branch
    %12 = sbr.rel (%p10) target = $region8
  $region5: #{multi_scale_block.1} parent=0 // loop_body
    %s14 = ssub.s32 %s9, 1
    %s15 = ssub.s32 %s9, 2
    %s22 = sadd.s32 1, %s17
    %p23 = scmp.ge.s32.totalorder %s22, 1
    %s24 = scalar_select %p23, 0, %s22
    %s25 = sadd.s32 1, %s16
    %s26 = scalar_select %p23, %s25, %s16
    %p27 = scmp.ge.s32.totalorder %s26, 2
    %s28 = scalar_select %p27, 0, %s26
    %s29 = ssub.s32 %s16, %s28
    %s30 = ssub.s32 %s17, %s24
    %s31 = sor.u32 %s29, %s30
    %p32 = scmp.eq.s32.totalorder %s31, 0
    %s34 = sadd.s32 %s33, 1
    %s35 = scalar_select %p32, %s33, %s34
    %p38 = pneg %p32
    %p39 = scmp.eq.s32.totalorder %s9, 1
    %p40 = por %p38, %p39
    %p41 = scmp.ne.s32.totalorder %s33, %s36
    %p42 = scmp.eq.s32.totalorder %s9, 0
    %p43 = por %p41, %p42
    %p44 = scmp.ne.s32.totalorder %s33, %s36
    %p45 = scmp.eq.s32.totalorder %s14, 1
    %p46 = por %p44, %p45
    %p47 = scmp.ne.s32.totalorder %s36, %s37
    %p48 = scmp.eq.s32.totalorder %s14, 0
    %p49 = por %p47, %p48
    %p50 = scmp.ne.s32.totalorder %s36, %s37
    %p51 = scmp.eq.s32.totalorder %s15, 1
    %p52 = por %p50, %p51
    %p54 = scmp.ne.s32.totalorder %s37, %s53
    %p55 = scmp.eq.s32.totalorder %s15, 0
    %p56 = por %p54, %p55
    %s58 = sadd.s32 %s57, 1
    %p61 = scmp.eq.s32.totalorder %s9, 1
    %p62 = scmp.ne.s32.totalorder %s57, %s59
    %p63 = scmp.eq.s32.totalorder %s9, 0
    %p64 = por %p62, %p63
    %p65 = scmp.ne.s32.totalorder %s57, %s59
    %p66 = scmp.eq.s32.totalorder %s14, 1
    %p67 = por %p65, %p66
    %p68 = scmp.ne.s32.totalorder %s59, %s60
    %p69 = scmp.eq.s32.totalorder %s14, 0
    %p70 = por %p68, %p69
    %p71 = scmp.ne.s32.totalorder %s59, %s60
    %p72 = scmp.eq.s32.totalorder %s15, 1
    %p73 = por %p71, %p72
    %p75 = scmp.ne.s32.totalorder %s60, %s74
    %p76 = scmp.eq.s32.totalorder %s15, 0
    %p77 = por %p75, %p76
    %s79 = sadd.s32 %s78, 1
    %p82 = scmp.eq.s32.totalorder %s9, 1
    %p83 = scmp.ne.s32.totalorder %s78, %s80
    %p84 = scmp.eq.s32.totalorder %s9, 0
    %p85 = por %p83, %p84
    %p86 = scmp.ne.s32.totalorder %s78, %s80
    %p87 = scmp.eq.s32.totalorder %s14, 1
    %p88 = por %p86, %p87
    %p89 = scmp.ne.s32.totalorder %s80, %s81
    %p90 = scmp.eq.s32.totalorder %s14, 0
    %p91 = por %p89, %p90
    %p92 = scmp.ne.s32.totalorder %s80, %s81
    %p93 = scmp.eq.s32.totalorder %s15, 1
    %p94 = por %p92, %p93
    %p96 = scmp.ne.s32.totalorder %s81, %s95
    %p97 = scmp.eq.s32.totalorder %s15, 0
    %p98 = por %p96, %p97
    %s99 = ssub.s32 %s16, %s28
    %s100 = ssub.s32 %s17, %s24
    %s101 = sor.u32 %s99, %s100
    %p102 = scmp.eq.s32.totalorder %s101, 0
    %s104 = sadd.s32 %s103, 1
    %s105 = scalar_select %p102, %s103, %s104
    %p108 = pneg %p102
    %p109 = scmp.eq.s32.totalorder %s9, 1
    %p110 = por %p108, %p109
    %p111 = scmp.ne.s32.totalorder %s103, %s106
    %p112 = scmp.eq.s32.totalorder %s9, 0
    %p113 = por %p111, %p112
    %p114 = scmp.ne.s32.totalorder %s103, %s106
    %p115 = scmp.eq.s32.totalorder %s14, 1
    %p116 = por %p114, %p115
    %p117 = scmp.ne.s32.totalorder %s106, %s107
    %p118 = scmp.eq.s32.totalorder %s14, 0
    %p119 = por %p117, %p118
    %p120 = scmp.ne.s32.totalorder %s106, %s107
    %p121 = scmp.eq.s32.totalorder %s15, 1
    %p122 = por %p120, %p121
    %p124 = scmp.ne.s32.totalorder %s107, %s123
    %p125 = scmp.eq.s32.totalorder %s15, 0
    %p126 = por %p124, %p125
    %p127 = scmp.le.s32.totalorder 1, %s9
    %p128 = scmp.lt.s32.totalorder %s9, 3
    %p129 = pnand %p127, %p128
    %p130 = pneg %p129
    // Predicated region
    $region9: #{multi_scale_block.1} parent=5 // pred_check
      _
    $region10: #{multi_scale_block.1} parent=5 // pred_check_branch
      %132 = sbr.rel (%p129) target = $region12
    $region11: #{multi_scale_block.1} parent=5 // pred_region
      %s133 = ssub.s32 %s9, 1
      // Predicated region
      $region13: #{multi_scale_block.1} parent=11 // pred_check
        %p134 = pneg %p70
      $region14: #{multi_scale_block.1} parent=11 // pred_check_branch
        %136 = sbr.rel (%p134) target = $region16
      $region15: #{multi_scale_block.1} parent=11 // pred_region
        _
      $region16: #{multi_scale_block.1} parent=11 // pred_fallthru
        _
      // Predicated region
      $region17: #{multi_scale_block.1} parent=11 // pred_check
        %p137 = pneg %p91
      $region18: #{multi_scale_block.1} parent=11 // pred_check_branch
        %139 = sbr.rel (%p137) target = $region20
      $region19: #{multi_scale_block.1} parent=11 // pred_region
        _
      $region20: #{multi_scale_block.1} parent=11 // pred_fallthru
        _
    $region12: #{multi_scale_block.1} parent=5 // pred_fallthru
      _
    %p140 = scmp.lt.s32.totalorder %s9, 2
    // Predicated region
    $region21: #{multi_scale_block.1} parent=5 // pred_check
      %p141 = pneg %p140
    $region22: #{multi_scale_block.1} parent=5 // pred_check_branch
      %143 = sbr.rel (%p141) target = $region24
    $region23: #{multi_scale_block.1} parent=5 // pred_region
      // Predicated region
      $region25: #{multi_scale_block.1} parent=23 // pred_check
        %p144 = pneg %p43
      $region26: #{multi_scale_block.1} parent=23 // pred_check_branch
        %146 = sbr.rel (%p144) target = $region28
      $region27: #{multi_scale_block.1} parent=23 // pred_region
        %p147 = scmp.lt.s32.totalorder %s16, 1
        %s148 = scalar_select %p147, %s16, 1
        %p149 = scmp.lt.s32.totalorder %s17, 0
        %s150 = scalar_select %p149, %s17, 0
        %s151 = smul.addr %s150, 5
        %s152 = smul.addr %s148, 5
        %s153 = sadd.s32 %s151, %s152
        %s154 = smul.addr %s153, 4
        %s155 = scalar_lea.vmem %s0, %s154
      $region28: #{multi_scale_block.1} parent=23 // pred_fallthru
        _
    $region24: #{multi_scale_block.1} parent=5 // pred_fallthru
      _
    %p156 = scmp.le.s32.totalorder 1, %s9
    %p157 = scmp.lt.s32.totalorder %s9, 3
    %p158 = pnand %p156, %p157
    %p159 = pneg %p158
    // Predicated region
    $region29: #{multi_scale_block.1} parent=5 // pred_check
      _
    $region30: #{multi_scale_block.1} parent=5 // pred_check_branch
      %161 = sbr.rel (%p158) target = $region32
    $region31: #{multi_scale_block.1} parent=5 // pred_region
      %s162 = ssub.s32 %s9, 1
      %p163 = scmp.lt.s32.totalorder %s18, 1
      %s164 = scalar_select %p163, %s18, 1
      %p165 = scmp.lt.s32.totalorder %s19, 0
      %s166 = scalar_select %p165, %s19, 0
      %s167 = smul.addr %s166, 5
      %s168 = smul.addr %s164, 5
      %s169 = sadd.s32 %s167, %s168
      %s170 = smul.addr %s169, 4
      %s171 = scalar_lea.vmem %s0, %s170
      %p172 = pneg %p49
      %p173 = pneg %p46
      %p174 = pneg %p70
      %p175 = pneg %p67
      %p176 = pneg %p91
      %p177 = pneg %p88
      %p178 = pneg %p119
      %p179 = pneg %p116
      %p180 = scmp.lt.s32.totalorder %s18, 1
      %s181 = scalar_select %p180, %s18, 1
      %p182 = scmp.lt.s32.totalorder %s19, 0
      %s183 = scalar_select %p182, %s19, 0
      %s184 = smul.addr %s183, 6
      %s185 = smul.addr %s181, 6
      %s186 = sadd.s32 %s184, %s185
      %s187 = smul.addr %s186, 4
      %s188 = scalar_lea.vmem %s3, %s187
      %p189 = scmp.lt.s32.totalorder %s18, 1
      %s190 = scalar_select %p189, %s18, 1
      %p191 = scmp.lt.s32.totalorder %s19, 0
      %s192 = scalar_select %p191, %s19, 0
      %s193 = smul.addr %s192, 5
      %s194 = smul.addr %s190, 5
      %s195 = sadd.s32 %s193, %s194
      %s196 = smul.addr %s195, 4
      %s197 = scalar_lea.vmem %s0, %s196
      %p198 = scmp.lt.s32.totalorder %s18, 1
      %s199 = scalar_select %p198, %s18, 1
      %p200 = scmp.lt.s32.totalorder %s19, 0
      %s201 = scalar_select %p200, %s19, 0
      %s202 = smul.addr %s201, 6
      %s203 = smul.addr %s199, 6
      %s204 = sadd.s32 %s202, %s203
      %s205 = smul.addr %s204, 4
      %s206 = scalar_lea.vmem %s3, %s205
      %v208 = vld [vmem:[%s197] sm:$0xff]
      %v209 = vld [vmem:[%s197 + $0x8] sm:$0xff]
      %v212 = vunpack.c.l.b16 %v208
      %v213 = vunpack.c.h.b16 %v208
      %v214 = vunpack.c.l.b16 %v209
      %v215 = vpack.c.b16 %v212, %v212
      %v216 = vpack.c.b16 %v213, %v213
      %v217 = vpack.c.b16 %v214, %v214
      %v218 = vunpack.c.h.b16 %v209
      %v219 = vpack.c.b16 %v218, %v218
      %220 = vrot.lane.b32.xlu0 %v215, 127
      %v221 = vpop.permute.xlu0 %220
      %222 = vrot.lane.b32.xlu0 %v216, 127
      %v223 = vpop.permute.xlu0 %222
      %224 = vrot.lane.b32.xlu0 %v217, 127
      %v225 = vpop.permute.xlu0 %224
      %226 = vrot.lane.b32.xlu0 %v219, 127
      %v227 = vpop.permute.xlu0 %226
      %vm228 = vcmask 1039360
      %v229 = vsel %vm228, %v221, %v223
      %v230 = vsel %vm228, %v223, %v225
      %v231 = vsel %vm228, %v225, %v227
      %232 = vrot.lane.b32.xlu0 %v215, 126
      %v233 = vpop.permute.xlu0 %232
      %234 = vrot.lane.b32.xlu0 %v216, 126
      %v235 = vpop.permute.xlu0 %234
      %236 = vrot.lane.b32.xlu0 %v217, 126
      %v237 = vpop.permute.xlu0 %236
      %238 = vrot.lane.b32.xlu0 %v219, 126
      %v239 = vpop.permute.xlu0 %238
      %vm240 = vcmask 1031168
      %v241 = vsel %vm240, %v233, %v235
      %v242 = vsel %vm240, %v235, %v237
      %v243 = vsel %vm240, %v237, %v239
      %244 = vrot.lane.b32.xlu0 %v215, 125
      %v245 = vpop.permute.xlu0 %244
      %246 = vrot.lane.b32.xlu0 %v216, 125
      %v247 = vpop.permute.xlu0 %246
      %248 = vrot.lane.b32.xlu0 %v217, 125
      %v249 = vpop.permute.xlu0 %248
      %250 = vrot.lane.b32.xlu0 %v219, 125
      %v251 = vpop.permute.xlu0 %250
      %vm252 = vcmask 1022976
      %v253 = vsel %vm252, %v245, %v247
      %v254 = vsel %vm252, %v247, %v249
      %v255 = vsel %vm252, %v249, %v251
      %256 = vrot.lane.b32.xlu0 %v215, 124
      %v257 = vpop.permute.xlu0 %256
      %258 = vrot.lane.b32.xlu0 %v216, 124
      %v259 = vpop.permute.xlu0 %258
      %260 = vrot.lane.b32.xlu0 %v217, 124
      %v261 = vpop.permute.xlu0 %260
      %262 = vrot.lane.b32.xlu0 %v219, 124
      %v263 = vpop.permute.xlu0 %262
      %vm264 = vcmask 1014784
      %v265 = vsel %vm264, %v257, %v259
      %v266 = vsel %vm264, %v259, %v261
      %v267 = vsel %vm264, %v261, %v263
      %268 = vrot.lane.b32.xlu0 %v215, 123
      %v269 = vpop.permute.xlu0 %268
      %270 = vrot.lane.b32.xlu0 %v216, 123
      %v271 = vpop.permute.xlu0 %270
      %272 = vrot.lane.b32.xlu0 %v217, 123
      %v273 = vpop.permute.xlu0 %272
      %274 = vrot.lane.b32.xlu0 %v219, 123
      %v275 = vpop.permute.xlu0 %274
      %vm276 = vcmask 1006592
      %v277 = vsel %vm276, %v269, %v271
      %v278 = vsel %vm276, %v271, %v273
      %v279 = vsel %vm276, %v273, %v275
      %280 = vrot.lane.b32.xlu0 %v215, 122
      %v281 = vpop.permute.xlu0 %280
      %282 = vrot.lane.b32.xlu0 %v216, 122
      %v283 = vpop.permute.xlu0 %282
      %284 = vrot.lane.b32.xlu0 %v217, 122
      %v285 = vpop.permute.xlu0 %284
      %286 = vrot.lane.b32.xlu0 %v219, 122
      %v287 = vpop.permute.xlu0 %286
      %vm288 = vcmask 998400
      %v289 = vsel %vm288, %v281, %v283
      %v290 = vsel %vm288, %v283, %v285
      %v291 = vsel %vm288, %v285, %v287
      %292 = vrot.lane.b32.xlu0 %v215, 121
      %v293 = vpop.permute.xlu0 %292
      %294 = vrot.lane.b32.xlu0 %v216, 121
      %v295 = vpop.permute.xlu0 %294
      %296 = vrot.lane.b32.xlu0 %v217, 121
      %v297 = vpop.permute.xlu0 %296
      %298 = vrot.lane.b32.xlu0 %v219, 121
      %v299 = vpop.permute.xlu0 %298
      %vm300 = vcmask 990208
      %v301 = vsel %vm300, %v293, %v295
      %v302 = vsel %vm300, %v295, %v297
      %v303 = vsel %vm300, %v297, %v299
      %304 = vrot.lane.b32.xlu0 %v215, 120
      %v305 = vpop.permute.xlu0 %304
      %306 = vrot.lane.b32.xlu0 %v216, 120
      %v307 = vpop.permute.xlu0 %306
      %308 = vrot.lane.b32.xlu0 %v217, 120
      %v309 = vpop.permute.xlu0 %308
      %310 = vrot.lane.b32.xlu0 %v219, 120
      %v311 = vpop.permute.xlu0 %310
      %vm312 = vcmask 982016
      %v313 = vsel %vm312, %v305, %v307
      %v314 = vsel %vm312, %v307, %v309
      %v315 = vsel %vm312, %v309, %v311
      %vm316 = vcmask 1043456
      %v319 = vsel %vm316, %v215, %v229
      %v323 = vsel %vm316, %v216, %v230
      %v327 = vsel %vm316, %v217, %v231
      %v331 = vsel %vm316, %v241, %v253
      %v335 = vsel %vm316, %v242, %v254
      %v339 = vsel %vm316, %v243, %v255
      %v343 = vsel %vm316, %v265, %v277
      %v347 = vsel %vm316, %v266, %v278
      %v351 = vsel %vm316, %v267, %v279
      %v355 = vsel %vm316, %v289, %v301
      %v359 = vsel %vm316, %v290, %v302
      %v363 = vsel %vm316, %v291, %v303
      %v365 = vld [vmem:[%s1] sm:$0xf]
      %v366 = vld [vmem:[%s1 + $0x4] sm:$0xf]
      %v369 = vsel %vm316, %v219, %v227
      %v372 = vsel %vm316, %v239, %v251
      %v375 = vsel %vm316, %v263, %v275
      %v378 = vsel %vm316, %v287, %v299
      %s379 = scalar_lea.vmem %s1, 8
      %v380 = vld [vmem:[%s379] sm:$0xf]
      %v381 = vld [vmem:[%s379 + $0x4] sm:$0xf]
      %v384 = vunpack.c.l.b16 %v380
      %v385 = vunpack.c.l.b16 %v381
      %v386 = vpack.c.b16 %v385, %v384
      %403 = vrot.lane.b32.xlu0 %v319, 106
      %v404 = vpop.permute.xlu0 %403
      %405 = vrot.lane.b32.xlu0 %v323, 106
      %v406 = vpop.permute.xlu0 %405
      %407 = vrot.lane.b32.xlu0 %v327, 106
      %v408 = vpop.permute.xlu0 %407
      %409 = vrot.lane.b32.xlu0 %v369, 106
      %v410 = vpop.permute.xlu0 %409
      %411 = vrot.lane.b32.xlu0 %v331, 106
      %v412 = vpop.permute.xlu0 %411
      %413 = vrot.lane.b32.xlu0 %v335, 106
      %v414 = vpop.permute.xlu0 %413
      %415 = vrot.lane.b32.xlu0 %v339, 106
      %v416 = vpop.permute.xlu0 %415
      %417 = vrot.lane.b32.xlu0 %v372, 106
      %v418 = vpop.permute.xlu0 %417
      %419 = vrot.lane.b32.xlu0 %v343, 106
      %v420 = vpop.permute.xlu0 %419
      %421 = vrot.lane.b32.xlu0 %v347, 106
      %v422 = vpop.permute.xlu0 %421
      %423 = vrot.lane.b32.xlu0 %v351, 106
      %v424 = vpop.permute.xlu0 %423
      %425 = vrot.lane.b32.xlu0 %v375, 106
      %v426 = vpop.permute.xlu0 %425
      %427 = vrot.lane.b32.xlu0 %v355, 106
      %v428 = vpop.permute.xlu0 %427
      %429 = vrot.lane.b32.xlu0 %v359, 106
      %v430 = vpop.permute.xlu0 %429
      %431 = vrot.lane.b32.xlu0 %v363, 106
      %v432 = vpop.permute.xlu0 %431
      %433 = vrot.lane.b32.xlu0 %v378, 106
      %v434 = vpop.permute.xlu0 %433
      %435 = vrot.lane.b32.xlu0 %v313, 106
      %v436 = vpop.permute.xlu0 %435
      %437 = vrot.lane.b32.xlu0 %v314, 106
      %v438 = vpop.permute.xlu0 %437
      %439 = vrot.lane.b32.xlu0 %v315, 106
      %v440 = vpop.permute.xlu0 %439
      %441 = vrot.lane.b32.xlu0 %v311, 106
      %v442 = vpop.permute.xlu0 %441
      %vm443 = vcmask 867328
      %v444 = vsel %vm443, %v404, %v406
      %v445 = vsel %vm443, %v406, %v408
      %v446 = vsel %vm443, %v408, %v410
      %v447 = vsel %vm443, %v412, %v414
      %v448 = vsel %vm443, %v414, %v416
      %v449 = vsel %vm443, %v416, %v418
      %v450 = vsel %vm443, %v420, %v422
      %v451 = vsel %vm443, %v422, %v424
      %v452 = vsel %vm443, %v424, %v426
      %v453 = vsel %vm443, %v428, %v430
      %v454 = vsel %vm443, %v430, %v432
      %v455 = vsel %vm443, %v432, %v434
      %v456 = vsel %vm443, %v436, %v438
      %v457 = vsel %vm443, %v438, %v440
      %v458 = vsel %vm443, %v440, %v442
      %vm471 = vcmask 588800
      %v473 = vsel %vm471, %v386, 0
      %v476 = vsel %vm316, %v456, 0
      %v479 = vsel %vm316, %v457, 0
      %v482 = vsel %vm316, %v458, 0
      %484 = vmatprep.subr.bf16.mxu0 0
      %485 = vmatpush1.bf16.msra.mxu0 0
      %486 = vmatprep.subr.bf16.mxu0 0
      %487 = vmatpush1.bf16.msra.mxu0 0
      %488 = vmatprep.subr.bf16.mxu0 0
      %489 = vmatpush1.bf16.msra.mxu0 0
      %490 = vmatprep.subr.bf16.mxu0 %v479
      %491 = vmatpush1.bf16.msra.mxu0 %v476
      %492 = vmatprep.subr.bf16.mxu0 %v454
      %493 = vmatpush1.bf16.msra.mxu0 %v453
      %494 = vmatprep.subr.bf16.mxu0 %v451
      %495 = vmatpush1.bf16.msra.mxu0 %v450
      %496 = vmatprep.subr.bf16.mxu0 %v448
      %497 = vmatpush1.bf16.msra.mxu0 %v447
      %498 = vmatprep.subr.bf16.mxu0 %v445
      %499 = vmatpush1.bf16.msra.mxu0 %v444
      %500 = vmatprep.subr.bf16.mxu0 0
      %501 = vmatpush2.bf16.msra.mxu0 0
      %502 = vmatprep.subr.bf16.mxu0 0
      %503 = vmatpush2.bf16.msra.mxu0 0
      %504 = vmatprep.subr.bf16.mxu0 0
      %505 = vmatpush2.bf16.msra.mxu0 0
      %506 = vmatprep.subr.bf16.mxu0 0
      %507 = vmatpush2.bf16.msra.mxu0 0
      %508 = vmatprep.subr.bf16.mxu0 0
      %509 = vmatpush2.bf16.msra.mxu0 0
      %510 = vmatprep.subr.bf16.mxu0 0
      %511 = vmatpush2.bf16.msra.mxu0 0
      %512 = vmatprep.subr.bf16.mxu0 0
      %513 = vmatpush2.bf16.msra.mxu0 0
      %514 = vmatprep.subr.bf16.mxu0 0
      %515 = vmatpush2.bf16.msra.mxu0 0
      %516 = vmatprep.mubr.bf16.mxu0 0
      %517 = vmatmul.mubr.bf16.gmra.mxu0 %v473
      %v518 = vpop.f32.mrf.mxu0
      %v519 = vadd.f32 0.0, %v518
      %v520 = vpop.f32.mrf.mxu0
      %v521 = vadd.f32 0.0, %v520
      %v522 = vpop.f32.mrf.mxu0
      %v523 = vadd.f32 0.0, %v522
      %v524 = vpop.f32.mrf.mxu0
      %v525 = vadd.f32 0.0, %v524
      %526 = vdwg.mxu0
      %527 = vmatprep.subr.bf16.mxu0 0
      %528 = vmatpush1.bf16.msra.mxu0 0
      %529 = vmatprep.subr.bf16.mxu0 0
      %530 = vmatpush1.bf16.msra.mxu0 0
      %531 = vmatprep.subr.bf16.mxu0 0
      %532 = vmatpush1.bf16.msra.mxu0 0
      %533 = vmatprep.subr.bf16.mxu0 0
      %534 = vmatpush1.bf16.msra.mxu0 %v482
      %535 = vmatprep.subr.bf16.mxu0 0
      %536 = vmatpush1.bf16.msra.mxu0 %v455
      %537 = vmatprep.subr.bf16.mxu0 0
      %538 = vmatpush1.bf16.msra.mxu0 %v452
      %539 = vmatprep.subr.bf16.mxu0 0
      %540 = vmatpush1.bf16.msra.mxu0 %v449
      %541 = vmatprep.subr.bf16.mxu0 0
      %542 = vmatpush1.bf16.msra.mxu0 %v446
      %543 = vmatprep.subr.bf16.mxu0 0
      %544 = vmatpush2.bf16.msra.mxu0 0
      %545 = vmatprep.subr.bf16.mxu0 0
      %546 = vmatpush2.bf16.msra.mxu0 0
      %547 = vmatprep.subr.bf16.mxu0 0
      %548 = vmatpush2.bf16.msra.mxu0 0
      %549 = vmatprep.subr.bf16.mxu0 0
      %550 = vmatpush2.bf16.msra.mxu0 0
      %551 = vmatprep.subr.bf16.mxu0 0
      %552 = vmatpush2.bf16.msra.mxu0 0
      %553 = vmatprep.subr.bf16.mxu0 0
      %554 = vmatpush2.bf16.msra.mxu0 0
      %555 = vmatprep.subr.bf16.mxu0 0
      %556 = vmatpush2.bf16.msra.mxu0 0
      %557 = vmatprep.subr.bf16.mxu0 0
      %558 = vmatpush2.bf16.msra.mxu0 0
      %559 = vmatprep.mubr.bf16.mxu0 0
      %560 = vmatmul.mubr.bf16.gmra.mxu0 %v473
      %v561 = vpop.f32.mrf.mxu0
      %v562 = vadd.f32 0.0, %v561
      %v563 = vpop.f32.mrf.mxu0
      %v564 = vpop.f32.mrf.mxu0
      %v565 = vadd.f32 0.0, %v564
      %v566 = vpop.f32.mrf.mxu0
      %567 = vdwg.mxu0
      %v570 = vunpack.c.l.b16 %v365
      %v571 = vunpack.c.l.b16 %v366
      %v572 = vpack.c.b16 %v571, %v570
      %v574 = vsel %vm471, %v572, 0
      %v577 = vsel %vm316, %v313, 0
      %v580 = vsel %vm316, %v314, 0
      %v583 = vsel %vm316, %v315, 0
      %585 = vmatprep.subr.bf16.mxu0 0
      %586 = vmatpush1.bf16.msra.mxu0 0
      %587 = vmatprep.subr.bf16.mxu0 0
      %588 = vmatpush1.bf16.msra.mxu0 0
      %589 = vmatprep.subr.bf16.mxu0 0
      %590 = vmatpush1.bf16.msra.mxu0 0
      %591 = vmatprep.subr.bf16.mxu0 %v580
      %592 = vmatpush1.bf16.msra.mxu0 %v577
      %593 = vmatprep.subr.bf16.mxu0 %v359
      %594 = vmatpush1.bf16.msra.mxu0 %v355
      %595 = vmatprep.subr.bf16.mxu0 %v347
      %596 = vmatpush1.bf16.msra.mxu0 %v343
      %597 = vmatprep.subr.bf16.mxu0 %v335
      %598 = vmatpush1.bf16.msra.mxu0 %v331
      %599 = vmatprep.subr.bf16.mxu0 %v323
      %600 = vmatpush1.bf16.msra.mxu0 %v319
      %601 = vmatprep.subr.bf16.mxu0 0
      %602 = vmatpush2.bf16.msra.mxu0 0
      %603 = vmatprep.subr.bf16.mxu0 0
      %604 = vmatpush2.bf16.msra.mxu0 0
      %605 = vmatprep.subr.bf16.mxu0 0
      %606 = vmatpush2.bf16.msra.mxu0 0
      %607 = vmatprep.subr.bf16.mxu0 0
      %608 = vmatpush2.bf16.msra.mxu0 0
      %609 = vmatprep.subr.bf16.mxu0 0
      %610 = vmatpush2.bf16.msra.mxu0 0
      %611 = vmatprep.subr.bf16.mxu0 0
      %612 = vmatpush2.bf16.msra.mxu0 0
      %613 = vmatprep.subr.bf16.mxu0 0
      %614 = vmatpush2.bf16.msra.mxu0 0
      %615 = vmatprep.subr.bf16.mxu0 0
      %616 = vmatpush2.bf16.msra.mxu0 0
      %617 = vmatprep.mubr.bf16.mxu0 0
      %618 = vmatmul.mubr.bf16.gmra.mxu0 %v574
      %v619 = vpop.f32.mrf.mxu0
      %v620 = vadd.f32 %v519, %v619
      %v621 = vpop.f32.mrf.mxu0
      %v622 = vadd.f32 %v521, %v621
      %v623 = vpop.f32.mrf.mxu0
      %v624 = vadd.f32 %v523, %v623
      %v625 = vpop.f32.mrf.mxu0
      %v626 = vadd.f32 %v525, %v625
      %627 = vdwg.mxu0
      %628 = vmatprep.subr.bf16.mxu0 0
      %629 = vmatpush1.bf16.msra.mxu0 0
      %630 = vmatprep.subr.bf16.mxu0 0
      %631 = vmatpush1.bf16.msra.mxu0 0
      %632 = vmatprep.subr.bf16.mxu0 0
      %633 = vmatpush1.bf16.msra.mxu0 0
      %634 = vmatprep.subr.bf16.mxu0 0
      %635 = vmatpush1.bf16.msra.mxu0 %v583
      %636 = vmatprep.subr.bf16.mxu0 0
      %637 = vmatpush1.bf16.msra.mxu0 %v363
      %638 = vmatprep.subr.bf16.mxu0 0
      %639 = vmatpush1.bf16.msra.mxu0 %v351
      %640 = vmatprep.subr.bf16.mxu0 0
      %641 = vmatpush1.bf16.msra.mxu0 %v339
      %642 = vmatprep.subr.bf16.mxu0 0
      %643 = vmatpush1.bf16.msra.mxu0 %v327
      %644 = vmatprep.subr.bf16.mxu0 0
      %645 = vmatpush2.bf16.msra.mxu0 0
      %646 = vmatprep.subr.bf16.mxu0 0
      %647 = vmatpush2.bf16.msra.mxu0 0
      %648 = vmatprep.subr.bf16.mxu0 0
      %649 = vmatpush2.bf16.msra.mxu0 0
      %650 = vmatprep.subr.bf16.mxu0 0
      %651 = vmatpush2.bf16.msra.mxu0 0
      %652 = vmatprep.subr.bf16.mxu0 0
      %653 = vmatpush2.bf16.msra.mxu0 0
      %654 = vmatprep.subr.bf16.mxu0 0
      %655 = vmatpush2.bf16.msra.mxu0 0
      %656 = vmatprep.subr.bf16.mxu0 0
      %657 = vmatpush2.bf16.msra.mxu0 0
      %658 = vmatprep.subr.bf16.mxu0 0
      %659 = vmatpush2.bf16.msra.mxu0 0
      %660 = vmatprep.mubr.bf16.mxu0 0
      %661 = vmatmul.mubr.bf16.gmra.mxu0 %v574
      %v662 = vpop.f32.mrf.mxu0
      %v663 = vadd.f32 %v562, %v662
      %v664 = vpop.f32.mrf.mxu0
      %v665 = vpop.f32.mrf.mxu0
      %v666 = vadd.f32 %v565, %v665
      %v667 = vpop.f32.mrf.mxu0
      %668 = vdwg.mxu0
      %s669 = scalar_lea.vmem %s1, 16
      %v670 = vld [vmem:[%s669] sm:$0xf]
      %v671 = vld [vmem:[%s669 + $0x4] sm:$0xf]
      %v674 = vunpack.c.l.b16 %v670
      %v675 = vunpack.c.l.b16 %v671
      %v676 = vpack.c.b16 %v675, %v674
      %677 = vrot.lane.b32.xlu0 %v319, 84
      %v678 = vpop.permute.xlu0 %677
      %679 = vrot.lane.b32.xlu0 %v323, 84
      %v680 = vpop.permute.xlu0 %679
      %681 = vrot.lane.b32.xlu0 %v327, 84
      %v682 = vpop.permute.xlu0 %681
      %683 = vrot.lane.b32.xlu0 %v369, 84
      %v684 = vpop.permute.xlu0 %683
      %685 = vrot.lane.b32.xlu0 %v331, 84
      %v686 = vpop.permute.xlu0 %685
      %687 = vrot.lane.b32.xlu0 %v335, 84
      %v688 = vpop.permute.xlu0 %687
      %689 = vrot.lane.b32.xlu0 %v339, 84
      %v690 = vpop.permute.xlu0 %689
      %691 = vrot.lane.b32.xlu0 %v372, 84
      %v692 = vpop.permute.xlu0 %691
      %693 = vrot.lane.b32.xlu0 %v343, 84
      %v694 = vpop.permute.xlu0 %693
      %695 = vrot.lane.b32.xlu0 %v347, 84
      %v696 = vpop.permute.xlu0 %695
      %697 = vrot.lane.b32.xlu0 %v351, 84
      %v698 = vpop.permute.xlu0 %697
      %699 = vrot.lane.b32.xlu0 %v375, 84
      %v700 = vpop.permute.xlu0 %699
      %701 = vrot.lane.b32.xlu0 %v355, 84
      %v702 = vpop.permute.xlu0 %701
      %703 = vrot.lane.b32.xlu0 %v359, 84
      %v704 = vpop.permute.xlu0 %703
      %705 = vrot.lane.b32.xlu0 %v363, 84
      %v706 = vpop.permute.xlu0 %705
      %707 = vrot.lane.b32.xlu0 %v378, 84
      %v708 = vpop.permute.xlu0 %707
      %709 = vrot.lane.b32.xlu0 %v313, 84
      %v710 = vpop.permute.xlu0 %709
      %711 = vrot.lane.b32.xlu0 %v314, 84
      %v712 = vpop.permute.xlu0 %711
      %713 = vrot.lane.b32.xlu0 %v315, 84
      %v714 = vpop.permute.xlu0 %713
      %715 = vrot.lane.b32.xlu0 %v311, 84
      %v716 = vpop.permute.xlu0 %715
      %vm717 = vcmask 687104
      %v718 = vsel %vm717, %v678, %v680
      %v719 = vsel %vm717, %v680, %v682
      %v720 = vsel %vm717, %v682, %v684
      %v721 = vsel %vm717, %v686, %v688
      %v722 = vsel %vm717, %v688, %v690
      %v723 = vsel %vm717, %v690, %v692
      %v724 = vsel %vm717, %v694, %v696
      %v725 = vsel %vm717, %v696, %v698
      %v726 = vsel %vm717, %v698, %v700
      %v727 = vsel %vm717, %v702, %v704
      %v728 = vsel %vm717, %v704, %v706
      %v729 = vsel %vm717, %v706, %v708
      %v730 = vsel %vm717, %v710, %v712
      %v731 = vsel %vm717, %v712, %v714
      %v732 = vsel %vm717, %v714, %v716
      %v746 = vsel %vm471, %v676, 0
      %v749 = vsel %vm316, %v730, 0
      %v752 = vsel %vm316, %v731, 0
      %v755 = vsel %vm316, %v732, 0
      %757 = vmatprep.subr.bf16.mxu0 0
      %758 = vmatpush1.bf16.msra.mxu0 0
      %759 = vmatprep.subr.bf16.mxu0 0
      %760 = vmatpush1.bf16.msra.mxu0 0
      %761 = vmatprep.subr.bf16.mxu0 0
      %762 = vmatpush1.bf16.msra.mxu0 0
      %763 = vmatprep.subr.bf16.mxu0 %v752
      %764 = vmatpush1.bf16.msra.mxu0 %v749
      %765 = vmatprep.subr.bf16.mxu0 %v728
      %766 = vmatpush1.bf16.msra.mxu0 %v727
      %767 = vmatprep.subr.bf16.mxu0 %v725
      %768 = vmatpush1.bf16.msra.mxu0 %v724
      %769 = vmatprep.subr.bf16.mxu0 %v722
      %770 = vmatpush1.bf16.msra.mxu0 %v721
      %771 = vmatprep.subr.bf16.mxu0 %v719
      %772 = vmatpush1.bf16.msra.mxu0 %v718
      %773 = vmatprep.subr.bf16.mxu0 0
      %774 = vmatpush2.bf16.msra.mxu0 0
      %775 = vmatprep.subr.bf16.mxu0 0
      %776 = vmatpush2.bf16.msra.mxu0 0
      %777 = vmatprep.subr.bf16.mxu0 0
      %778 = vmatpush2.bf16.msra.mxu0 0
      %779 = vmatprep.subr.bf16.mxu0 0
      %780 = vmatpush2.bf16.msra.mxu0 0
      %781 = vmatprep.subr.bf16.mxu0 0
      %782 = vmatpush2.bf16.msra.mxu0 0
      %783 = vmatprep.subr.bf16.mxu0 0
      %784 = vmatpush2.bf16.msra.mxu0 0
      %785 = vmatprep.subr.bf16.mxu0 0
      %786 = vmatpush2.bf16.msra.mxu0 0
      %787 = vmatprep.subr.bf16.mxu0 0
      %788 = vmatpush2.bf16.msra.mxu0 0
      %789 = vmatprep.mubr.bf16.mxu0 0
      %790 = vmatmul.mubr.bf16.gmra.mxu0 %v746
      %v791 = vpop.f32.mrf.mxu0
      %v792 = vadd.f32 0.0, %v791
      %v793 = vpop.f32.mrf.mxu0
      %v794 = vadd.f32 0.0, %v793
      %v795 = vpop.f32.mrf.mxu0
      %v796 = vadd.f32 0.0, %v795
      %v797 = vpop.f32.mrf.mxu0
      %v798 = vadd.f32 0.0, %v797
      %799 = vdwg.mxu0
      %800 = vmatprep.subr.bf16.mxu0 0
      %801 = vmatpush1.bf16.msra.mxu0 0
      %802 = vmatprep.subr.bf16.mxu0 0
      %803 = vmatpush1.bf16.msra.mxu0 0
      %804 = vmatprep.subr.bf16.mxu0 0
      %805 = vmatpush1.bf16.msra.mxu0 0
      %806 = vmatprep.subr.bf16.mxu0 0
      %807 = vmatpush1.bf16.msra.mxu0 %v755
      %808 = vmatprep.subr.bf16.mxu0 0
      %809 = vmatpush1.bf16.msra.mxu0 %v729
      %810 = vmatprep.subr.bf16.mxu0 0
      %811 = vmatpush1.bf16.msra.mxu0 %v726
      %812 = vmatprep.subr.bf16.mxu0 0
      %813 = vmatpush1.bf16.msra.mxu0 %v723
      %814 = vmatprep.subr.bf16.mxu0 0
      %815 = vmatpush1.bf16.msra.mxu0 %v720
      %816 = vmatprep.subr.bf16.mxu0 0
      %817 = vmatpush2.bf16.msra.mxu0 0
      %818 = vmatprep.subr.bf16.mxu0 0
      %819 = vmatpush2.bf16.msra.mxu0 0
      %820 = vmatprep.subr.bf16.mxu0 0
      %821 = vmatpush2.bf16.msra.mxu0 0
      %822 = vmatprep.subr.bf16.mxu0 0
      %823 = vmatpush2.bf16.msra.mxu0 0
      %824 = vmatprep.subr.bf16.mxu0 0
      %825 = vmatpush2.bf16.msra.mxu0 0
      %826 = vmatprep.subr.bf16.mxu0 0
      %827 = vmatpush2.bf16.msra.mxu0 0
      %828 = vmatprep.subr.bf16.mxu0 0
      %829 = vmatpush2.bf16.msra.mxu0 0
      %830 = vmatprep.subr.bf16.mxu0 0
      %831 = vmatpush2.bf16.msra.mxu0 0
      %832 = vmatprep.mubr.bf16.mxu0 0
      %833 = vmatmul.mubr.bf16.gmra.mxu0 %v746
      %v834 = vpop.f32.mrf.mxu0
      %v835 = vadd.f32 0.0, %v834
      %v836 = vpop.f32.mrf.mxu0
      %v837 = vpop.f32.mrf.mxu0
      %v838 = vadd.f32 0.0, %v837
      %v839 = vpop.f32.mrf.mxu0
      %840 = vdwg.mxu0
      %v841 = vadd.f32 %v620, %v792
      %v842 = vadd.f32 %v622, %v794
      %v843 = vadd.f32 %v663, %v835
      %v844 = vadd.f32 %v624, %v796
      %v845 = vadd.f32 %v626, %v798
      %v846 = vadd.f32 %v666, %v838
      %s847 = scalar_lea.vmem %s1, 24
      %v848 = vld [vmem:[%s847] sm:$0xf]
      %v849 = vld [vmem:[%s847 + $0x4] sm:$0xf]
      %v852 = vunpack.c.l.b16 %v848
      %v853 = vunpack.c.l.b16 %v849
      %v854 = vpack.c.b16 %v853, %v852
      %855 = vrot.lane.b32.xlu0 %v319, 62
      %v856 = vpop.permute.xlu0 %855
      %857 = vrot.lane.b32.xlu0 %v323, 62
      %v858 = vpop.permute.xlu0 %857
      %859 = vrot.lane.b32.xlu0 %v327, 62
      %v860 = vpop.permute.xlu0 %859
      %861 = vrot.lane.b32.xlu0 %v369, 62
      %v862 = vpop.permute.xlu0 %861
      %863 = vrot.lane.b32.xlu0 %v331, 62
      %v864 = vpop.permute.xlu0 %863
      %865 = vrot.lane.b32.xlu0 %v335, 62
      %v866 = vpop.permute.xlu0 %865
      %867 = vrot.lane.b32.xlu0 %v339, 62
      %v868 = vpop.permute.xlu0 %867
      %869 = vrot.lane.b32.xlu0 %v372, 62
      %v870 = vpop.permute.xlu0 %869
      %871 = vrot.lane.b32.xlu0 %v343, 62
      %v872 = vpop.permute.xlu0 %871
      %873 = vrot.lane.b32.xlu0 %v347, 62
      %v874 = vpop.permute.xlu0 %873
      %875 = vrot.lane.b32.xlu0 %v351, 62
      %v876 = vpop.permute.xlu0 %875
      %877 = vrot.lane.b32.xlu0 %v375, 62
      %v878 = vpop.permute.xlu0 %877
      %879 = vrot.lane.b32.xlu0 %v355, 62
      %v880 = vpop.permute.xlu0 %879
      %881 = vrot.lane.b32.xlu0 %v359, 62
      %v882 = vpop.permute.xlu0 %881
      %883 = vrot.lane.b32.xlu0 %v363, 62
      %v884 = vpop.permute.xlu0 %883
      %885 = vrot.lane.b32.xlu0 %v378, 62
      %v886 = vpop.permute.xlu0 %885
      %887 = vrot.lane.b32.xlu0 %v313, 62
      %v888 = vpop.permute.xlu0 %887
      %889 = vrot.lane.b32.xlu0 %v314, 62
      %v890 = vpop.permute.xlu0 %889
      %891 = vrot.lane.b32.xlu0 %v315, 62
      %v892 = vpop.permute.xlu0 %891
      %893 = vrot.lane.b32.xlu0 %v311, 62
      %v894 = vpop.permute.xlu0 %893
      %vm895 = vcmask 506880
      %v896 = vsel %vm895, %v856, %v858
      %v897 = vsel %vm895, %v858, %v860
      %v898 = vsel %vm895, %v860, %v862
      %v899 = vsel %vm895, %v864, %v866
      %v900 = vsel %vm895, %v866, %v868
      %v901 = vsel %vm895, %v868, %v870
      %v902 = vsel %vm895, %v872, %v874
      %v903 = vsel %vm895, %v874, %v876
      %v904 = vsel %vm895, %v876, %v878
      %v905 = vsel %vm895, %v880, %v882
      %v906 = vsel %vm895, %v882, %v884
      %v907 = vsel %vm895, %v884, %v886
      %v908 = vsel %vm895, %v888, %v890
      %v909 = vsel %vm895, %v890, %v892
      %v910 = vsel %vm895, %v892, %v894
      %v924 = vsel %vm471, %v854, 0
      %v927 = vsel %vm316, %v908, 0
      %v930 = vsel %vm316, %v909, 0
      %v933 = vsel %vm316, %v910, 0
      %935 = vmatprep.subr.bf16.mxu0 0
      %936 = vmatpush1.bf16.msra.mxu0 0
      %937 = vmatprep.subr.bf16.mxu0 0
      %938 = vmatpush1.bf16.msra.mxu0 0
      %939 = vmatprep.subr.bf16.mxu0 0
      %940 = vmatpush1.bf16.msra.mxu0 0
      %941 = vmatprep.subr.bf16.mxu0 %v930
      %942 = vmatpush1.bf16.msra.mxu0 %v927
      %943 = vmatprep.subr.bf16.mxu0 %v906
      %944 = vmatpush1.bf16.msra.mxu0 %v905
      %945 = vmatprep.subr.bf16.mxu0 %v903
      %946 = vmatpush1.bf16.msra.mxu0 %v902
      %947 = vmatprep.subr.bf16.mxu0 %v900
      %948 = vmatpush1.bf16.msra.mxu0 %v899
      %949 = vmatprep.subr.bf16.mxu0 %v897
      %950 = vmatpush1.bf16.msra.mxu0 %v896
      %951 = vmatprep.subr.bf16.mxu0 0
      %952 = vmatpush2.bf16.msra.mxu0 0
      %953 = vmatprep.subr.bf16.mxu0 0
      %954 = vmatpush2.bf16.msra.mxu0 0
      %955 = vmatprep.subr.bf16.mxu0 0
      %956 = vmatpush2.bf16.msra.mxu0 0
      %957 = vmatprep.subr.bf16.mxu0 0
      %958 = vmatpush2.bf16.msra.mxu0 0
      %959 = vmatprep.subr.bf16.mxu0 0
      %960 = vmatpush2.bf16.msra.mxu0 0
      %961 = vmatprep.subr.bf16.mxu0 0
      %962 = vmatpush2.bf16.msra.mxu0 0
      %963 = vmatprep.subr.bf16.mxu0 0
      %964 = vmatpush2.bf16.msra.mxu0 0
      %965 = vmatprep.subr.bf16.mxu0 0
      %966 = vmatpush2.bf16.msra.mxu0 0
      %967 = vmatprep.mubr.bf16.mxu0 0
      %968 = vmatmul.mubr.bf16.gmra.mxu0 %v924
      %v969 = vpop.f32.mrf.mxu0
      %v970 = vadd.f32 0.0, %v969
      %v971 = vpop.f32.mrf.mxu0
      %v972 = vadd.f32 0.0, %v971
      %v973 = vpop.f32.mrf.mxu0
      %v974 = vadd.f32 0.0, %v973
      %v975 = vpop.f32.mrf.mxu0
      %v976 = vadd.f32 0.0, %v975
      %977 = vdwg.mxu0
      %978 = vmatprep.subr.bf16.mxu0 0
      %979 = vmatpush1.bf16.msra.mxu0 0
      %980 = vmatprep.subr.bf16.mxu0 0
      %981 = vmatpush1.bf16.msra.mxu0 0
      %982 = vmatprep.subr.bf16.mxu0 0
      %983 = vmatpush1.bf16.msra.mxu0 0
      %984 = vmatprep.subr.bf16.mxu0 0
      %985 = vmatpush1.bf16.msra.mxu0 %v933
      %986 = vmatprep.subr.bf16.mxu0 0
      %987 = vmatpush1.bf16.msra.mxu0 %v907
      %988 = vmatprep.subr.bf16.mxu0 0
      %989 = vmatpush1.bf16.msra.mxu0 %v904
      %990 = vmatprep.subr.bf16.mxu0 0
      %991 = vmatpush1.bf16.msra.mxu0 %v901
      %992 = vmatprep.subr.bf16.mxu0 0
      %993 = vmatpush1.bf16.msra.mxu0 %v898
      %994 = vmatprep.subr.bf16.mxu0 0
      %995 = vmatpush2.bf16.msra.mxu0 0
      %996 = vmatprep.subr.bf16.mxu0 0
      %997 = vmatpush2.bf16.msra.mxu0 0
      %998 = vmatprep.subr.bf16.mxu0 0
      %999 = vmatpush2.bf16.msra.mxu0 0
      %1000 = vmatprep.subr.bf16.mxu0 0
      %1001 = vmatpush2.bf16.msra.mxu0 0
      %1002 = vmatprep.subr.bf16.mxu0 0
      %1003 = vmatpush2.bf16.msra.mxu0 0
      %1004 = vmatprep.subr.bf16.mxu0 0
      %1005 = vmatpush2.bf16.msra.mxu0 0
      %1006 = vmatprep.subr.bf16.mxu0 0
      %1007 = vmatpush2.bf16.msra.mxu0 0
      %1008 = vmatprep.subr.bf16.mxu0 0
      %1009 = vmatpush2.bf16.msra.mxu0 0
      %1010 = vmatprep.mubr.bf16.mxu0 0
      %1011 = vmatmul.mubr.bf16.gmra.mxu0 %v924
      %v1012 = vpop.f32.mrf.mxu0
      %v1013 = vadd.f32 0.0, %v1012
      %v1014 = vpop.f32.mrf.mxu0
      %v1015 = vpop.f32.mrf.mxu0
      %v1016 = vadd.f32 0.0, %v1015
      %v1017 = vpop.f32.mrf.mxu0
      %1018 = vdwg.mxu0
      %v1019 = vadd.f32 %v841, %v970
      %v1020 = vadd.f32 %v842, %v972
      %v1021 = vadd.f32 %v843, %v1013
      %v1022 = vadd.f32 %v844, %v974
      %v1023 = vadd.f32 %v845, %v976
      %v1024 = vadd.f32 %v846, %v1016
      %s1025 = scalar_lea.vmem %s1, 32
      %v1026 = vld [vmem:[%s1025] sm:$0xf]
      %v1027 = vld [vmem:[%s1025 + $0x4] sm:$0xf]
      %v1030 = vunpack.c.l.b16 %v1026
      %v1031 = vunpack.c.l.b16 %v1027
      %v1032 = vpack.c.b16 %v1031, %v1030
      %1033 = vrot.lane.b32.xlu0 %v319, 40
      %v1034 = vpop.permute.xlu0 %1033
      %1035 = vrot.lane.b32.xlu0 %v323, 40
      %v1036 = vpop.permute.xlu0 %1035
      %1037 = vrot.lane.b32.xlu0 %v327, 40
      %v1038 = vpop.permute.xlu0 %1037
      %1039 = vrot.lane.b32.xlu0 %v369, 40
      %v1040 = vpop.permute.xlu0 %1039
      %1041 = vrot.lane.b32.xlu0 %v331, 40
      %v1042 = vpop.permute.xlu0 %1041
      %1043 = vrot.lane.b32.xlu0 %v335, 40
      %v1044 = vpop.permute.xlu0 %1043
      %1045 = vrot.lane.b32.xlu0 %v339, 40
      %v1046 = vpop.permute.xlu0 %1045
      %1047 = vrot.lane.b32.xlu0 %v372, 40
      %v1048 = vpop.permute.xlu0 %1047
      %1049 = vrot.lane.b32.xlu0 %v343, 40
      %v1050 = vpop.permute.xlu0 %1049
      %1051 = vrot.lane.b32.xlu0 %v347, 40
      %v1052 = vpop.permute.xlu0 %1051
      %1053 = vrot.lane.b32.xlu0 %v351, 40
      %v1054 = vpop.permute.xlu0 %1053
      %1055 = vrot.lane.b32.xlu0 %v375, 40
      %v1056 = vpop.permute.xlu0 %1055
      %1057 = vrot.lane.b32.xlu0 %v355, 40
      %v1058 = vpop.permute.xlu0 %1057
      %1059 = vrot.lane.b32.xlu0 %v359, 40
      %v1060 = vpop.permute.xlu0 %1059
      %1061 = vrot.lane.b32.xlu0 %v363, 40
      %v1062 = vpop.permute.xlu0 %1061
      %1063 = vrot.lane.b32.xlu0 %v378, 40
      %v1064 = vpop.permute.xlu0 %1063
      %1065 = vrot.lane.b32.xlu0 %v313, 40
      %v1066 = vpop.permute.xlu0 %1065
      %1067 = vrot.lane.b32.xlu0 %v314, 40
      %v1068 = vpop.permute.xlu0 %1067
      %1069 = vrot.lane.b32.xlu0 %v315, 40
      %v1070 = vpop.permute.xlu0 %1069
      %1071 = vrot.lane.b32.xlu0 %v311, 40
      %v1072 = vpop.permute.xlu0 %1071
      %vm1073 = vcmask 326656
      %v1074 = vsel %vm1073, %v1034, %v1036
      %v1075 = vsel %vm1073, %v1036, %v1038
      %v1076 = vsel %vm1073, %v1038, %v1040
      %v1077 = vsel %vm1073, %v1042, %v1044
      %v1078 = vsel %vm1073, %v1044, %v1046
      %v1079 = vsel %vm1073, %v1046, %v1048
      %v1080 = vsel %vm1073, %v1050, %v1052
      %v1081 = vsel %vm1073, %v1052, %v1054
      %v1082 = vsel %vm1073, %v1054, %v1056
      %v1083 = vsel %vm1073, %v1058, %v1060
      %v1084 = vsel %vm1073, %v1060, %v1062
      %v1085 = vsel %vm1073, %v1062, %v1064
      %v1086 = vsel %vm1073, %v1066, %v1068
      %v1087 = vsel %vm1073, %v1068, %v1070
      %v1088 = vsel %vm1073, %v1070, %v1072
      %v1102 = vsel %vm471, %v1032, 0
      %v1105 = vsel %vm316, %v1086, 0
      %v1108 = vsel %vm316, %v1087, 0
      %v1111 = vsel %vm316, %v1088, 0
      %1113 = vmatprep.subr.bf16.mxu0 0
      %1114 = vmatpush1.bf16.msra.mxu0 0
      %1115 = vmatprep.subr.bf16.mxu0 0
      %1116 = vmatpush1.bf16.msra.mxu0 0
      %1117 = vmatprep.subr.bf16.mxu0 0
      %1118 = vmatpush1.bf16.msra.mxu0 0
      %1119 = vmatprep.subr.bf16.mxu0 %v1108
      %1120 = vmatpush1.bf16.msra.mxu0 %v1105
      %1121 = vmatprep.subr.bf16.mxu0 %v1084
      %1122 = vmatpush1.bf16.msra.mxu0 %v1083
      %1123 = vmatprep.subr.bf16.mxu0 %v1081
      %1124 = vmatpush1.bf16.msra.mxu0 %v1080
      %1125 = vmatprep.subr.bf16.mxu0 %v1078
      %1126 = vmatpush1.bf16.msra.mxu0 %v1077
      %1127 = vmatprep.subr.bf16.mxu0 %v1075
      %1128 = vmatpush1.bf16.msra.mxu0 %v1074
      %1129 = vmatprep.subr.bf16.mxu0 0
      %1130 = vmatpush2.bf16.msra.mxu0 0
      %1131 = vmatprep.subr.bf16.mxu0 0
      %1132 = vmatpush2.bf16.msra.mxu0 0
      %1133 = vmatprep.subr.bf16.mxu0 0
      %1134 = vmatpush2.bf16.msra.mxu0 0
      %1135 = vmatprep.subr.bf16.mxu0 0
      %1136 = vmatpush2.bf16.msra.mxu0 0
      %1137 = vmatprep.subr.bf16.mxu0 0
      %1138 = vmatpush2.bf16.msra.mxu0 0
      %1139 = vmatprep.subr.bf16.mxu0 0
      %1140 = vmatpush2.bf16.msra.mxu0 0
      %1141 = vmatprep.subr.bf16.mxu0 0
      %1142 = vmatpush2.bf16.msra.mxu0 0
      %1143 = vmatprep.subr.bf16.mxu0 0
      %1144 = vmatpush2.bf16.msra.mxu0 0
      %1145 = vmatprep.mubr.bf16.mxu0 0
      %1146 = vmatmul.mubr.bf16.gmra.mxu0 %v1102
      %v1147 = vpop.f32.mrf.mxu0
      %v1148 = vadd.f32 0.0, %v1147
      %v1149 = vpop.f32.mrf.mxu0
      %v1150 = vadd.f32 0.0, %v1149
      %v1151 = vpop.f32.mrf.mxu0
      %v1152 = vadd.f32 0.0, %v1151
      %v1153 = vpop.f32.mrf.mxu0
      %v1154 = vadd.f32 0.0, %v1153
      %1155 = vdwg.mxu0
      %1156 = vmatprep.subr.bf16.mxu0 0
      %1157 = vmatpush1.bf16.msra.mxu0 0
      %1158 = vmatprep.subr.bf16.mxu0 0
      %1159 = vmatpush1.bf16.msra.mxu0 0
      %1160 = vmatprep.subr.bf16.mxu0 0
      %1161 = vmatpush1.bf16.msra.mxu0 0
      %1162 = vmatprep.subr.bf16.mxu0 0
      %1163 = vmatpush1.bf16.msra.mxu0 %v1111
      %1164 = vmatprep.subr.bf16.mxu0 0
      %1165 = vmatpush1.bf16.msra.mxu0 %v1085
      %1166 = vmatprep.subr.bf16.mxu0 0
      %1167 = vmatpush1.bf16.msra.mxu0 %v1082
      %1168 = vmatprep.subr.bf16.mxu0 0
      %1169 = vmatpush1.bf16.msra.mxu0 %v1079
      %1170 = vmatprep.subr.bf16.mxu0 0
      %1171 = vmatpush1.bf16.msra.mxu0 %v1076
      %1172 = vmatprep.subr.bf16.mxu0 0
      %1173 = vmatpush2.bf16.msra.mxu0 0
      %1174 = vmatprep.subr.bf16.mxu0 0
      %1175 = vmatpush2.bf16.msra.mxu0 0
      %1176 = vmatprep.subr.bf16.mxu0 0
      %1177 = vmatpush2.bf16.msra.mxu0 0
      %1178 = vmatprep.subr.bf16.mxu0 0
      %1179 = vmatpush2.bf16.msra.mxu0 0
      %1180 = vmatprep.subr.bf16.mxu0 0
      %1181 = vmatpush2.bf16.msra.mxu0 0
      %1182 = vmatprep.subr.bf16.mxu0 0
      %1183 = vmatpush2.bf16.msra.mxu0 0
      %1184 = vmatprep.subr.bf16.mxu0 0
      %1185 = vmatpush2.bf16.msra.mxu0 0
      %1186 = vmatprep.subr.bf16.mxu0 0
      %1187 = vmatpush2.bf16.msra.mxu0 0
      %1188 = vmatprep.mubr.bf16.mxu0 0
      %1189 = vmatmul.mubr.bf16.gmra.mxu0 %v1102
      %v1190 = vpop.f32.mrf.mxu0
      %v1191 = vadd.f32 0.0, %v1190
      %v1192 = vpop.f32.mrf.mxu0
      %v1193 = vpop.f32.mrf.mxu0
      %v1194 = vadd.f32 0.0, %v1193
      %v1195 = vpop.f32.mrf.mxu0
      %1196 = vdwg.mxu0
      %v1197 = vadd.f32 %v1019, %v1148
      %v1198 = vadd.f32 %v1020, %v1150
      %v1199 = vadd.f32 %v1021, %v1191
      %v1200 = vadd.f32 %v1022, %v1152
      %v1201 = vadd.f32 %v1023, %v1154
      %v1202 = vadd.f32 %v1024, %v1194
      %s1203 = scalar_lea.vmem %s1, 40
      %v1204 = vld [vmem:[%s1203] sm:$0xf]
      %v1205 = vld [vmem:[%s1203 + $0x4] sm:$0xf]
      %v1208 = vunpack.c.l.b16 %v1204
      %v1209 = vunpack.c.l.b16 %v1205
      %v1210 = vpack.c.b16 %v1209, %v1208
      %1211 = vrot.lane.b32.xlu0 %v319, 18
      %v1212 = vpop.permute.xlu0 %1211
      %1213 = vrot.lane.b32.xlu0 %v323, 18
      %v1214 = vpop.permute.xlu0 %1213
      %1215 = vrot.lane.b32.xlu0 %v327, 18
      %v1216 = vpop.permute.xlu0 %1215
      %1217 = vrot.lane.b32.xlu0 %v369, 18
      %v1218 = vpop.permute.xlu0 %1217
      %1219 = vrot.lane.b32.xlu0 %v331, 18
      %v1220 = vpop.permute.xlu0 %1219
      %1221 = vrot.lane.b32.xlu0 %v335, 18
      %v1222 = vpop.permute.xlu0 %1221
      %1223 = vrot.lane.b32.xlu0 %v339, 18
      %v1224 = vpop.permute.xlu0 %1223
      %1225 = vrot.lane.b32.xlu0 %v372, 18
      %v1226 = vpop.permute.xlu0 %1225
      %1227 = vrot.lane.b32.xlu0 %v343, 18
      %v1228 = vpop.permute.xlu0 %1227
      %1229 = vrot.lane.b32.xlu0 %v347, 18
      %v1230 = vpop.permute.xlu0 %1229
      %1231 = vrot.lane.b32.xlu0 %v351, 18
      %v1232 = vpop.permute.xlu0 %1231
      %1233 = vrot.lane.b32.xlu0 %v375, 18
      %v1234 = vpop.permute.xlu0 %1233
      %1235 = vrot.lane.b32.xlu0 %v355, 18
      %v1236 = vpop.permute.xlu0 %1235
      %1237 = vrot.lane.b32.xlu0 %v359, 18
      %v1238 = vpop.permute.xlu0 %1237
      %1239 = vrot.lane.b32.xlu0 %v363, 18
      %v1240 = vpop.permute.xlu0 %1239
      %1241 = vrot.lane.b32.xlu0 %v378, 18
      %v1242 = vpop.permute.xlu0 %1241
      %1243 = vrot.lane.b32.xlu0 %v313, 18
      %v1244 = vpop.permute.xlu0 %1243
      %1245 = vrot.lane.b32.xlu0 %v314, 18
      %v1246 = vpop.permute.xlu0 %1245
      %1247 = vrot.lane.b32.xlu0 %v315, 18
      %v1248 = vpop.permute.xlu0 %1247
      %1249 = vrot.lane.b32.xlu0 %v311, 18
      %v1250 = vpop.permute.xlu0 %1249
      %vm1251 = vcmask 146432
      %v1252 = vsel %vm1251, %v1212, %v1214
      %v1253 = vsel %vm1251, %v1214, %v1216
      %v1254 = vsel %vm1251, %v1216, %v1218
      %v1255 = vsel %vm1251, %v1220, %v1222
      %v1256 = vsel %vm1251, %v1222, %v1224
      %v1257 = vsel %vm1251, %v1224, %v1226
      %v1258 = vsel %vm1251, %v1228, %v1230
      %v1259 = vsel %vm1251, %v1230, %v1232
      %v1260 = vsel %vm1251, %v1232, %v1234
      %v1261 = vsel %vm1251, %v1236, %v1238
      %v1262 = vsel %vm1251, %v1238, %v1240
      %v1263 = vsel %vm1251, %v1240, %v1242
      %v1264 = vsel %vm1251, %v1244, %v1246
      %v1265 = vsel %vm1251, %v1246, %v1248
      %v1266 = vsel %vm1251, %v1248, %v1250
      %v1280 = vsel %vm471, %v1210, 0
      %v1283 = vsel %vm316, %v1264, 0
      %v1286 = vsel %vm316, %v1265, 0
      %v1289 = vsel %vm316, %v1266, 0
      %1291 = vmatprep.subr.bf16.mxu0 0
      %1292 = vmatpush1.bf16.msra.mxu0 0
      %1293 = vmatprep.subr.bf16.mxu0 0
      %1294 = vmatpush1.bf16.msra.mxu0 0
      %1295 = vmatprep.subr.bf16.mxu0 0
      %1296 = vmatpush1.bf16.msra.mxu0 0
      %1297 = vmatprep.subr.bf16.mxu0 %v1286
      %1298 = vmatpush1.bf16.msra.mxu0 %v1283
      %1299 = vmatprep.subr.bf16.mxu0 %v1262
      %1300 = vmatpush1.bf16.msra.mxu0 %v1261
      %1301 = vmatprep.subr.bf16.mxu0 %v1259
      %1302 = vmatpush1.bf16.msra.mxu0 %v1258
      %1303 = vmatprep.subr.bf16.mxu0 %v1256
      %1304 = vmatpush1.bf16.msra.mxu0 %v1255
      %1305 = vmatprep.subr.bf16.mxu0 %v1253
      %1306 = vmatpush1.bf16.msra.mxu0 %v1252
      %1307 = vmatprep.subr.bf16.mxu0 0
      %1308 = vmatpush2.bf16.msra.mxu0 0
      %1309 = vmatprep.subr.bf16.mxu0 0
      %1310 = vmatpush2.bf16.msra.mxu0 0
      %1311 = vmatprep.subr.bf16.mxu0 0
      %1312 = vmatpush2.bf16.msra.mxu0 0
      %1313 = vmatprep.subr.bf16.mxu0 0
      %1314 = vmatpush2.bf16.msra.mxu0 0
      %1315 = vmatprep.subr.bf16.mxu0 0
      %1316 = vmatpush2.bf16.msra.mxu0 0
      %1317 = vmatprep.subr.bf16.mxu0 0
      %1318 = vmatpush2.bf16.msra.mxu0 0
      %1319 = vmatprep.subr.bf16.mxu0 0
      %1320 = vmatpush2.bf16.msra.mxu0 0
      %1321 = vmatprep.subr.bf16.mxu0 0
      %1322 = vmatpush2.bf16.msra.mxu0 0
      %1323 = vmatprep.mubr.bf16.mxu0 0
      %1324 = vmatmul.mubr.bf16.gmra.mxu0 %v1280
      %v1325 = vpop.f32.mrf.mxu0
      %v1326 = vadd.f32 0.0, %v1325
      %v1327 = vpop.f32.mrf.mxu0
      %v1328 = vadd.f32 0.0, %v1327
      %v1329 = vpop.f32.mrf.mxu0
      %v1330 = vadd.f32 0.0, %v1329
      %v1331 = vpop.f32.mrf.mxu0
      %v1332 = vadd.f32 0.0, %v1331
      %1333 = vdwg.mxu0
      %1334 = vmatprep.subr.bf16.mxu0 0
      %1335 = vmatpush1.bf16.msra.mxu0 0
      %1336 = vmatprep.subr.bf16.mxu0 0
      %1337 = vmatpush1.bf16.msra.mxu0 0
      %1338 = vmatprep.subr.bf16.mxu0 0
      %1339 = vmatpush1.bf16.msra.mxu0 0
      %1340 = vmatprep.subr.bf16.mxu0 0
      %1341 = vmatpush1.bf16.msra.mxu0 %v1289
      %1342 = vmatprep.subr.bf16.mxu0 0
      %1343 = vmatpush1.bf16.msra.mxu0 %v1263
      %1344 = vmatprep.subr.bf16.mxu0 0
      %1345 = vmatpush1.bf16.msra.mxu0 %v1260
      %1346 = vmatprep.subr.bf16.mxu0 0
      %1347 = vmatpush1.bf16.msra.mxu0 %v1257
      %1348 = vmatprep.subr.bf16.mxu0 0
      %1349 = vmatpush1.bf16.msra.mxu0 %v1254
      %1350 = vmatprep.subr.bf16.mxu0 0
      %1351 = vmatpush2.bf16.msra.mxu0 0
      %1352 = vmatprep.subr.bf16.mxu0 0
      %1353 = vmatpush2.bf16.msra.mxu0 0
      %1354 = vmatprep.subr.bf16.mxu0 0
      %1355 = vmatpush2.bf16.msra.mxu0 0
      %1356 = vmatprep.subr.bf16.mxu0 0
      %1357 = vmatpush2.bf16.msra.mxu0 0
      %1358 = vmatprep.subr.bf16.mxu0 0
      %1359 = vmatpush2.bf16.msra.mxu0 0
      %1360 = vmatprep.subr.bf16.mxu0 0
      %1361 = vmatpush2.bf16.msra.mxu0 0
      %1362 = vmatprep.subr.bf16.mxu0 0
      %1363 = vmatpush2.bf16.msra.mxu0 0
      %1364 = vmatprep.subr.bf16.mxu0 0
      %1365 = vmatpush2.bf16.msra.mxu0 0
      %1366 = vmatprep.mubr.bf16.mxu0 0
      %1367 = vmatmul.mubr.bf16.gmra.mxu0 %v1280
      %v1368 = vpop.f32.mrf.mxu0
      %v1369 = vadd.f32 0.0, %v1368
      %v1370 = vpop.f32.mrf.mxu0
      %v1371 = vpop.f32.mrf.mxu0
      %v1372 = vadd.f32 0.0, %v1371
      %v1373 = vpop.f32.mrf.mxu0
      %1374 = vdwg.mxu0
      %v1375 = vadd.f32 %v1197, %v1326
      %v1376 = vadd.f32 %v1198, %v1328
      %v1377 = vadd.f32 %v1199, %v1369
      %v1378 = vadd.f32 %v1200, %v1330
      %v1379 = vadd.f32 %v1201, %v1332
      %v1380 = vadd.f32 %v1202, %v1372
      %v1381 = vld [vmem:[%s197 + $0x4] sm:$0xff]
      %v1382 = vld [vmem:[%s197 + $0xc] sm:$0xff]
      %v1385 = vunpack.c.l.b16 %v1381
      %v1386 = vunpack.c.h.b16 %v1381
      %v1387 = vunpack.c.l.b16 %v1382
      %v1388 = vunpack.c.h.b16 %v1382
      %v1389 = vpack.c.b16 %v1385, %v1385
      %v1390 = vpack.c.b16 %v1386, %v1386
      %v1391 = vpack.c.b16 %v1387, %v1387
      %v1392 = vpack.c.b16 %v1388, %v1388
      %1393 = vrot.lane.b32.xlu0 %v1389, 127
      %v1394 = vpop.permute.xlu0 %1393
      %1395 = vrot.lane.b32.xlu0 %v1390, 127
      %v1396 = vpop.permute.xlu0 %1395
      %1397 = vrot.lane.b32.xlu0 %v1391, 127
      %v1398 = vpop.permute.xlu0 %1397
      %1399 = vrot.lane.b32.xlu0 %v1392, 127
      %v1400 = vpop.permute.xlu0 %1399
      %v1401 = vsel %vm228, %v1394, %v1396
      %v1402 = vsel %vm228, %v1396, %v1398
      %v1403 = vsel %vm228, %v1398, %v1400
      %1404 = vrot.lane.b32.xlu0 %v1389, 126
      %v1405 = vpop.permute.xlu0 %1404
      %1406 = vrot.lane.b32.xlu0 %v1390, 126
      %v1407 = vpop.permute.xlu0 %1406
      %1408 = vrot.lane.b32.xlu0 %v1391, 126
      %v1409 = vpop.permute.xlu0 %1408
      %1410 = vrot.lane.b32.xlu0 %v1392, 126
      %v1411 = vpop.permute.xlu0 %1410
      %v1412 = vsel %vm240, %v1405, %v1407
      %v1413 = vsel %vm240, %v1407, %v1409
      %v1414 = vsel %vm240, %v1409, %v1411
      %1415 = vrot.lane.b32.xlu0 %v1389, 125
      %v1416 = vpop.permute.xlu0 %1415
      %1417 = vrot.lane.b32.xlu0 %v1390, 125
      %v1418 = vpop.permute.xlu0 %1417
      %1419 = vrot.lane.b32.xlu0 %v1391, 125
      %v1420 = vpop.permute.xlu0 %1419
      %1421 = vrot.lane.b32.xlu0 %v1392, 125
      %v1422 = vpop.permute.xlu0 %1421
      %v1423 = vsel %vm252, %v1416, %v1418
      %v1424 = vsel %vm252, %v1418, %v1420
      %v1425 = vsel %vm252, %v1420, %v1422
      %1426 = vrot.lane.b32.xlu0 %v1389, 124
      %v1427 = vpop.permute.xlu0 %1426
      %1428 = vrot.lane.b32.xlu0 %v1390, 124
      %v1429 = vpop.permute.xlu0 %1428
      %1430 = vrot.lane.b32.xlu0 %v1391, 124
      %v1431 = vpop.permute.xlu0 %1430
      %1432 = vrot.lane.b32.xlu0 %v1392, 124
      %v1433 = vpop.permute.xlu0 %1432
      %v1434 = vsel %vm264, %v1427, %v1429
      %v1435 = vsel %vm264, %v1429, %v1431
      %v1436 = vsel %vm264, %v1431, %v1433
      %1437 = vrot.lane.b32.xlu0 %v1389, 123
      %v1438 = vpop.permute.xlu0 %1437
      %1439 = vrot.lane.b32.xlu0 %v1390, 123
      %v1440 = vpop.permute.xlu0 %1439
      %1441 = vrot.lane.b32.xlu0 %v1391, 123
      %v1442 = vpop.permute.xlu0 %1441
      %1443 = vrot.lane.b32.xlu0 %v1392, 123
      %v1444 = vpop.permute.xlu0 %1443
      %v1445 = vsel %vm276, %v1438, %v1440
      %v1446 = vsel %vm276, %v1440, %v1442
      %v1447 = vsel %vm276, %v1442, %v1444
      %1448 = vrot.lane.b32.xlu0 %v1389, 122
      %v1449 = vpop.permute.xlu0 %1448
      %1450 = vrot.lane.b32.xlu0 %v1390, 122
      %v1451 = vpop.permute.xlu0 %1450
      %1452 = vrot.lane.b32.xlu0 %v1391, 122
      %v1453 = vpop.permute.xlu0 %1452
      %1454 = vrot.lane.b32.xlu0 %v1392, 122
      %v1455 = vpop.permute.xlu0 %1454
      %v1456 = vsel %vm288, %v1449, %v1451
      %v1457 = vsel %vm288, %v1451, %v1453
      %v1458 = vsel %vm288, %v1453, %v1455
      %1459 = vrot.lane.b32.xlu0 %v1389, 121
      %v1460 = vpop.permute.xlu0 %1459
      %1461 = vrot.lane.b32.xlu0 %v1390, 121
      %v1462 = vpop.permute.xlu0 %1461
      %1463 = vrot.lane.b32.xlu0 %v1391, 121
      %v1464 = vpop.permute.xlu0 %1463
      %1465 = vrot.lane.b32.xlu0 %v1392, 121
      %v1466 = vpop.permute.xlu0 %1465
      %v1467 = vsel %vm300, %v1460, %v1462
      %v1468 = vsel %vm300, %v1462, %v1464
      %v1469 = vsel %vm300, %v1464, %v1466
      %1470 = vrot.lane.b32.xlu0 %v1389, 120
      %v1471 = vpop.permute.xlu0 %1470
      %1472 = vrot.lane.b32.xlu0 %v1390, 120
      %v1473 = vpop.permute.xlu0 %1472
      %1474 = vrot.lane.b32.xlu0 %v1391, 120
      %v1475 = vpop.permute.xlu0 %1474
      %1476 = vrot.lane.b32.xlu0 %v1392, 120
      %v1477 = vpop.permute.xlu0 %1476
      %v1478 = vsel %vm312, %v1471, %v1473
      %v1479 = vsel %vm312, %v1473, %v1475
      %v1480 = vsel %vm312, %v1475, %v1477
      %v1483 = vsel %vm316, %v1389, %v1401
      %v1486 = vsel %vm316, %v1390, %v1402
      %v1489 = vsel %vm316, %v1391, %v1403
      %v1492 = vsel %vm316, %v1392, %v1400
      %v1495 = vsel %vm316, %v1412, %v1423
      %v1498 = vsel %vm316, %v1413, %v1424
      %v1501 = vsel %vm316, %v1414, %v1425
      %v1504 = vsel %vm316, %v1411, %v1422
      %v1507 = vsel %vm316, %v1434, %v1445
      %v1510 = vsel %vm316, %v1435, %v1446
      %v1513 = vsel %vm316, %v1436, %v1447
      %v1516 = vsel %vm316, %v1433, %v1444
      %v1519 = vsel %vm316, %v1456, %v1467
      %v1522 = vsel %vm316, %v1457, %v1468
      %v1525 = vsel %vm316, %v1458, %v1469
      %v1528 = vsel %vm316, %v1455, %v1466
      %s1529 = scalar_lea.vmem %s1, 48
      %v1530 = vld [vmem:[%s1529] sm:$0xf]
      %v1531 = vld [vmem:[%s1529 + $0x4] sm:$0xf]
      %v1534 = vunpack.c.l.b16 %v1530
      %v1535 = vunpack.c.l.b16 %v1531
      %v1536 = vpack.c.b16 %v1535, %v1534
      %1553 = vrot.lane.b32.xlu0 %v1483, 124
      %v1554 = vpop.permute.xlu0 %1553
      %1555 = vrot.lane.b32.xlu0 %v1486, 124
      %v1556 = vpop.permute.xlu0 %1555
      %1557 = vrot.lane.b32.xlu0 %v1489, 124
      %v1558 = vpop.permute.xlu0 %1557
      %1559 = vrot.lane.b32.xlu0 %v1492, 124
      %v1560 = vpop.permute.xlu0 %1559
      %1561 = vrot.lane.b32.xlu0 %v1495, 124
      %v1562 = vpop.permute.xlu0 %1561
      %1563 = vrot.lane.b32.xlu0 %v1498, 124
      %v1564 = vpop.permute.xlu0 %1563
      %1565 = vrot.lane.b32.xlu0 %v1501, 124
      %v1566 = vpop.permute.xlu0 %1565
      %1567 = vrot.lane.b32.xlu0 %v1504, 124
      %v1568 = vpop.permute.xlu0 %1567
      %1569 = vrot.lane.b32.xlu0 %v1507, 124
      %v1570 = vpop.permute.xlu0 %1569
      %1571 = vrot.lane.b32.xlu0 %v1510, 124
      %v1572 = vpop.permute.xlu0 %1571
      %1573 = vrot.lane.b32.xlu0 %v1513, 124
      %v1574 = vpop.permute.xlu0 %1573
      %1575 = vrot.lane.b32.xlu0 %v1516, 124
      %v1576 = vpop.permute.xlu0 %1575
      %1577 = vrot.lane.b32.xlu0 %v1519, 124
      %v1578 = vpop.permute.xlu0 %1577
      %1579 = vrot.lane.b32.xlu0 %v1522, 124
      %v1580 = vpop.permute.xlu0 %1579
      %1581 = vrot.lane.b32.xlu0 %v1525, 124
      %v1582 = vpop.permute.xlu0 %1581
      %1583 = vrot.lane.b32.xlu0 %v1528, 124
      %v1584 = vpop.permute.xlu0 %1583
      %1585 = vrot.lane.b32.xlu0 %v1478, 124
      %v1586 = vpop.permute.xlu0 %1585
      %1587 = vrot.lane.b32.xlu0 %v1479, 124
      %v1588 = vpop.permute.xlu0 %1587
      %1589 = vrot.lane.b32.xlu0 %v1480, 124
      %v1590 = vpop.permute.xlu0 %1589
      %1591 = vrot.lane.b32.xlu0 %v1477, 124
      %v1592 = vpop.permute.xlu0 %1591
      %v1593 = vsel %vm264, %v1554, %v1556
      %v1594 = vsel %vm264, %v1556, %v1558
      %v1595 = vsel %vm264, %v1558, %v1560
      %v1596 = vsel %vm264, %v1562, %v1564
      %v1597 = vsel %vm264, %v1564, %v1566
      %v1598 = vsel %vm264, %v1566, %v1568
      %v1599 = vsel %vm264, %v1570, %v1572
      %v1600 = vsel %vm264, %v1572, %v1574
      %v1601 = vsel %vm264, %v1574, %v1576
      %v1602 = vsel %vm264, %v1578, %v1580
      %v1603 = vsel %vm264, %v1580, %v1582
      %v1604 = vsel %vm264, %v1582, %v1584
      %v1605 = vsel %vm264, %v1586, %v1588
      %v1606 = vsel %vm264, %v1588, %v1590
      %v1607 = vsel %vm264, %v1590, %v1592
      %v1621 = vsel %vm471, %v1536, 0
      %v1624 = vsel %vm316, %v1605, 0
      %v1627 = vsel %vm316, %v1606, 0
      %v1630 = vsel %vm316, %v1607, 0
      %1632 = vmatprep.subr.bf16.mxu0 0
      %1633 = vmatpush1.bf16.msra.mxu0 0
      %1634 = vmatprep.subr.bf16.mxu0 0
      %1635 = vmatpush1.bf16.msra.mxu0 0
      %1636 = vmatprep.subr.bf16.mxu0 0
      %1637 = vmatpush1.bf16.msra.mxu0 0
      %1638 = vmatprep.subr.bf16.mxu0 %v1627
      %1639 = vmatpush1.bf16.msra.mxu0 %v1624
      %1640 = vmatprep.subr.bf16.mxu0 %v1603
      %1641 = vmatpush1.bf16.msra.mxu0 %v1602
      %1642 = vmatprep.subr.bf16.mxu0 %v1600
      %1643 = vmatpush1.bf16.msra.mxu0 %v1599
      %1644 = vmatprep.subr.bf16.mxu0 %v1597
      %1645 = vmatpush1.bf16.msra.mxu0 %v1596
      %1646 = vmatprep.subr.bf16.mxu0 %v1594
      %1647 = vmatpush1.bf16.msra.mxu0 %v1593
      %1648 = vmatprep.subr.bf16.mxu0 0
      %1649 = vmatpush2.bf16.msra.mxu0 0
      %1650 = vmatprep.subr.bf16.mxu0 0
      %1651 = vmatpush2.bf16.msra.mxu0 0
      %1652 = vmatprep.subr.bf16.mxu0 0
      %1653 = vmatpush2.bf16.msra.mxu0 0
      %1654 = vmatprep.subr.bf16.mxu0 0
      %1655 = vmatpush2.bf16.msra.mxu0 0
      %1656 = vmatprep.subr.bf16.mxu0 0
      %1657 = vmatpush2.bf16.msra.mxu0 0
      %1658 = vmatprep.subr.bf16.mxu0 0
      %1659 = vmatpush2.bf16.msra.mxu0 0
      %1660 = vmatprep.subr.bf16.mxu0 0
      %1661 = vmatpush2.bf16.msra.mxu0 0
      %1662 = vmatprep.subr.bf16.mxu0 0
      %1663 = vmatpush2.bf16.msra.mxu0 0
      %1664 = vmatprep.mubr.bf16.mxu0 0
      %1665 = vmatmul.mubr.bf16.gmra.mxu0 %v1621
      %v1666 = vpop.f32.mrf.mxu0
      %v1667 = vadd.f32 0.0, %v1666
      %v1668 = vpop.f32.mrf.mxu0
      %v1669 = vadd.f32 0.0, %v1668
      %v1670 = vpop.f32.mrf.mxu0
      %v1671 = vadd.f32 0.0, %v1670
      %v1672 = vpop.f32.mrf.mxu0
      %v1673 = vadd.f32 0.0, %v1672
      %1674 = vdwg.mxu0
      %1675 = vmatprep.subr.bf16.mxu0 0
      %1676 = vmatpush1.bf16.msra.mxu0 0
      %1677 = vmatprep.subr.bf16.mxu0 0
      %1678 = vmatpush1.bf16.msra.mxu0 0
      %1679 = vmatprep.subr.bf16.mxu0 0
      %1680 = vmatpush1.bf16.msra.mxu0 0
      %1681 = vmatprep.subr.bf16.mxu0 0
      %1682 = vmatpush1.bf16.msra.mxu0 %v1630
      %1683 = vmatprep.subr.bf16.mxu0 0
      %1684 = vmatpush1.bf16.msra.mxu0 %v1604
      %1685 = vmatprep.subr.bf16.mxu0 0
      %1686 = vmatpush1.bf16.msra.mxu0 %v1601
      %1687 = vmatprep.subr.bf16.mxu0 0
      %1688 = vmatpush1.bf16.msra.mxu0 %v1598
      %1689 = vmatprep.subr.bf16.mxu0 0
      %1690 = vmatpush1.bf16.msra.mxu0 %v1595
      %1691 = vmatprep.subr.bf16.mxu0 0
      %1692 = vmatpush2.bf16.msra.mxu0 0
      %1693 = vmatprep.subr.bf16.mxu0 0
      %1694 = vmatpush2.bf16.msra.mxu0 0
      %1695 = vmatprep.subr.bf16.mxu0 0
      %1696 = vmatpush2.bf16.msra.mxu0 0
      %1697 = vmatprep.subr.bf16.mxu0 0
      %1698 = vmatpush2.bf16.msra.mxu0 0
      %1699 = vmatprep.subr.bf16.mxu0 0
      %1700 = vmatpush2.bf16.msra.mxu0 0
      %1701 = vmatprep.subr.bf16.mxu0 0
      %1702 = vmatpush2.bf16.msra.mxu0 0
      %1703 = vmatprep.subr.bf16.mxu0 0
      %1704 = vmatpush2.bf16.msra.mxu0 0
      %1705 = vmatprep.subr.bf16.mxu0 0
      %1706 = vmatpush2.bf16.msra.mxu0 0
      %1707 = vmatprep.mubr.bf16.mxu0 0
      %1708 = vmatmul.mubr.bf16.gmra.mxu0 %v1621
      %v1709 = vpop.f32.mrf.mxu0
      %v1710 = vadd.f32 0.0, %v1709
      %v1711 = vpop.f32.mrf.mxu0
      %v1712 = vpop.f32.mrf.mxu0
      %v1713 = vadd.f32 0.0, %v1712
      %v1714 = vpop.f32.mrf.mxu0
      %1715 = vdwg.mxu0
      %v1716 = vadd.f32 %v1375, %v1667
      %v1717 = vadd.f32 %v1376, %v1669
      %v1718 = vadd.f32 %v1377, %v1710
      %v1719 = vadd.f32 %v1378, %v1671
      %v1720 = vadd.f32 %v1379, %v1673
      %v1721 = vadd.f32 %v1380, %v1713
      %s1722 = scalar_lea.vmem %s1, 56
      %v1723 = vld [vmem:[%s1722] sm:$0xf]
      %v1724 = vld [vmem:[%s1722 + $0x4] sm:$0xf]
      %v1727 = vunpack.c.l.b16 %v1723
      %v1728 = vunpack.c.l.b16 %v1724
      %v1729 = vpack.c.b16 %v1728, %v1727
      %1730 = vrot.lane.b32.xlu0 %v1483, 102
      %v1731 = vpop.permute.xlu0 %1730
      %1732 = vrot.lane.b32.xlu0 %v1486, 102
      %v1733 = vpop.permute.xlu0 %1732
      %1734 = vrot.lane.b32.xlu0 %v1489, 102
      %v1735 = vpop.permute.xlu0 %1734
      %1736 = vrot.lane.b32.xlu0 %v1492, 102
      %v1737 = vpop.permute.xlu0 %1736
      %1738 = vrot.lane.b32.xlu0 %v1495, 102
      %v1739 = vpop.permute.xlu0 %1738
      %1740 = vrot.lane.b32.xlu0 %v1498, 102
      %v1741 = vpop.permute.xlu0 %1740
      %1742 = vrot.lane.b32.xlu0 %v1501, 102
      %v1743 = vpop.permute.xlu0 %1742
      %1744 = vrot.lane.b32.xlu0 %v1504, 102
      %v1745 = vpop.permute.xlu0 %1744
      %1746 = vrot.lane.b32.xlu0 %v1507, 102
      %v1747 = vpop.permute.xlu0 %1746
      %1748 = vrot.lane.b32.xlu0 %v1510, 102
      %v1749 = vpop.permute.xlu0 %1748
      %1750 = vrot.lane.b32.xlu0 %v1513, 102
      %v1751 = vpop.permute.xlu0 %1750
      %1752 = vrot.lane.b32.xlu0 %v1516, 102
      %v1753 = vpop.permute.xlu0 %1752
      %1754 = vrot.lane.b32.xlu0 %v1519, 102
      %v1755 = vpop.permute.xlu0 %1754
      %1756 = vrot.lane.b32.xlu0 %v1522, 102
      %v1757 = vpop.permute.xlu0 %1756
      %1758 = vrot.lane.b32.xlu0 %v1525, 102
      %v1759 = vpop.permute.xlu0 %1758
      %1760 = vrot.lane.b32.xlu0 %v1528, 102
      %v1761 = vpop.permute.xlu0 %1760
      %1762 = vrot.lane.b32.xlu0 %v1478, 102
      %v1763 = vpop.permute.xlu0 %1762
      %1764 = vrot.lane.b32.xlu0 %v1479, 102
      %v1765 = vpop.permute.xlu0 %1764
      %1766 = vrot.lane.b32.xlu0 %v1480, 102
      %v1767 = vpop.permute.xlu0 %1766
      %1768 = vrot.lane.b32.xlu0 %v1477, 102
      %v1769 = vpop.permute.xlu0 %1768
      %vm1770 = vcmask 834560
      %v1771 = vsel %vm1770, %v1731, %v1733
      %v1772 = vsel %vm1770, %v1733, %v1735
      %v1773 = vsel %vm1770, %v1735, %v1737
      %v1774 = vsel %vm1770, %v1739, %v1741
      %v1775 = vsel %vm1770, %v1741, %v1743
      %v1776 = vsel %vm1770, %v1743, %v1745
      %v1777 = vsel %vm1770, %v1747, %v1749
      %v1778 = vsel %vm1770, %v1749, %v1751
      %v1779 = vsel %vm1770, %v1751, %v1753
      %v1780 = vsel %vm1770, %v1755, %v1757
      %v1781 = vsel %vm1770, %v1757, %v1759
      %v1782 = vsel %vm1770, %v1759, %v1761
      %v1783 = vsel %vm1770, %v1763, %v1765
      %v1784 = vsel %vm1770, %v1765, %v1767
      %v1785 = vsel %vm1770, %v1767, %v1769
      %v1799 = vsel %vm471, %v1729, 0
      %v1802 = vsel %vm316, %v1783, 0
      %v1805 = vsel %vm316, %v1784, 0
      %v1808 = vsel %vm316, %v1785, 0
      %1810 = vmatprep.subr.bf16.mxu0 0
      %1811 = vmatpush1.bf16.msra.mxu0 0
      %1812 = vmatprep.subr.bf16.mxu0 0
      %1813 = vmatpush1.bf16.msra.mxu0 0
      %1814 = vmatprep.subr.bf16.mxu0 0
      %1815 = vmatpush1.bf16.msra.mxu0 0
      %1816 = vmatprep.subr.bf16.mxu0 %v1805
      %1817 = vmatpush1.bf16.msra.mxu0 %v1802
      %1818 = vmatprep.subr.bf16.mxu0 %v1781
      %1819 = vmatpush1.bf16.msra.mxu0 %v1780
      %1820 = vmatprep.subr.bf16.mxu0 %v1778
      %1821 = vmatpush1.bf16.msra.mxu0 %v1777
      %1822 = vmatprep.subr.bf16.mxu0 %v1775
      %1823 = vmatpush1.bf16.msra.mxu0 %v1774
      %1824 = vmatprep.subr.bf16.mxu0 %v1772
      %1825 = vmatpush1.bf16.msra.mxu0 %v1771
      %1826 = vmatprep.subr.bf16.mxu0 0
      %1827 = vmatpush2.bf16.msra.mxu0 0
      %1828 = vmatprep.subr.bf16.mxu0 0
      %1829 = vmatpush2.bf16.msra.mxu0 0
      %1830 = vmatprep.subr.bf16.mxu0 0
      %1831 = vmatpush2.bf16.msra.mxu0 0
      %1832 = vmatprep.subr.bf16.mxu0 0
      %1833 = vmatpush2.bf16.msra.mxu0 0
      %1834 = vmatprep.subr.bf16.mxu0 0
      %1835 = vmatpush2.bf16.msra.mxu0 0
      %1836 = vmatprep.subr.bf16.mxu0 0
      %1837 = vmatpush2.bf16.msra.mxu0 0
      %1838 = vmatprep.subr.bf16.mxu0 0
      %1839 = vmatpush2.bf16.msra.mxu0 0
      %1840 = vmatprep.subr.bf16.mxu0 0
      %1841 = vmatpush2.bf16.msra.mxu0 0
      %1842 = vmatprep.mubr.bf16.mxu0 0
      %1843 = vmatmul.mubr.bf16.gmra.mxu0 %v1799
      %v1844 = vpop.f32.mrf.mxu0
      %v1845 = vadd.f32 0.0, %v1844
      %v1846 = vpop.f32.mrf.mxu0
      %v1847 = vadd.f32 0.0, %v1846
      %v1848 = vpop.f32.mrf.mxu0
      %v1849 = vadd.f32 0.0, %v1848
      %v1850 = vpop.f32.mrf.mxu0
      %v1851 = vadd.f32 0.0, %v1850
      %1852 = vdwg.mxu0
      %1853 = vmatprep.subr.bf16.mxu0 0
      %1854 = vmatpush1.bf16.msra.mxu0 0
      %1855 = vmatprep.subr.bf16.mxu0 0
      %1856 = vmatpush1.bf16.msra.mxu0 0
      %1857 = vmatprep.subr.bf16.mxu0 0
      %1858 = vmatpush1.bf16.msra.mxu0 0
      %1859 = vmatprep.subr.bf16.mxu0 0
      %1860 = vmatpush1.bf16.msra.mxu0 %v1808
      %1861 = vmatprep.subr.bf16.mxu0 0
      %1862 = vmatpush1.bf16.msra.mxu0 %v1782
      %1863 = vmatprep.subr.bf16.mxu0 0
      %1864 = vmatpush1.bf16.msra.mxu0 %v1779
      %1865 = vmatprep.subr.bf16.mxu0 0
      %1866 = vmatpush1.bf16.msra.mxu0 %v1776
      %1867 = vmatprep.subr.bf16.mxu0 0
      %1868 = vmatpush1.bf16.msra.mxu0 %v1773
      %1869 = vmatprep.subr.bf16.mxu0 0
      %1870 = vmatpush2.bf16.msra.mxu0 0
      %1871 = vmatprep.subr.bf16.mxu0 0
      %1872 = vmatpush2.bf16.msra.mxu0 0
      %1873 = vmatprep.subr.bf16.mxu0 0
      %1874 = vmatpush2.bf16.msra.mxu0 0
      %1875 = vmatprep.subr.bf16.mxu0 0
      %1876 = vmatpush2.bf16.msra.mxu0 0
      %1877 = vmatprep.subr.bf16.mxu0 0
      %1878 = vmatpush2.bf16.msra.mxu0 0
      %1879 = vmatprep.subr.bf16.mxu0 0
      %1880 = vmatpush2.bf16.msra.mxu0 0
      %1881 = vmatprep.subr.bf16.mxu0 0
      %1882 = vmatpush2.bf16.msra.mxu0 0
      %1883 = vmatprep.subr.bf16.mxu0 0
      %1884 = vmatpush2.bf16.msra.mxu0 0
      %1885 = vmatprep.mubr.bf16.mxu0 0
      %1886 = vmatmul.mubr.bf16.gmra.mxu0 %v1799
      %v1887 = vpop.f32.mrf.mxu0
      %v1888 = vadd.f32 0.0, %v1887
      %v1889 = vpop.f32.mrf.mxu0
      %v1890 = vpop.f32.mrf.mxu0
      %v1891 = vadd.f32 0.0, %v1890
      %v1892 = vpop.f32.mrf.mxu0
      %1893 = vdwg.mxu0
      %v1894 = vadd.f32 %v1716, %v1845
      %v1895 = vadd.f32 %v1717, %v1847
      %v1896 = vadd.f32 %v1718, %v1888
      %v1897 = vadd.f32 %v1719, %v1849
      %v1898 = vadd.f32 %v1720, %v1851
      %v1899 = vadd.f32 %v1721, %v1891
      %s1900 = scalar_lea.vmem %s1, 64
      %v1901 = vld [vmem:[%s1900] sm:$0xf]
      %v1902 = vld [vmem:[%s1900 + $0x4] sm:$0xf]
      %v1905 = vunpack.c.l.b16 %v1901
      %v1906 = vunpack.c.l.b16 %v1902
      %v1907 = vpack.c.b16 %v1906, %v1905
      %1908 = vrot.lane.b32.xlu0 %v1483, 80
      %v1909 = vpop.permute.xlu0 %1908
      %1910 = vrot.lane.b32.xlu0 %v1486, 80
      %v1911 = vpop.permute.xlu0 %1910
      %1912 = vrot.lane.b32.xlu0 %v1489, 80
      %v1913 = vpop.permute.xlu0 %1912
      %1914 = vrot.lane.b32.xlu0 %v1492, 80
      %v1915 = vpop.permute.xlu0 %1914
      %1916 = vrot.lane.b32.xlu0 %v1495, 80
      %v1917 = vpop.permute.xlu0 %1916
      %1918 = vrot.lane.b32.xlu0 %v1498, 80
      %v1919 = vpop.permute.xlu0 %1918
      %1920 = vrot.lane.b32.xlu0 %v1501, 80
      %v1921 = vpop.permute.xlu0 %1920
      %1922 = vrot.lane.b32.xlu0 %v1504, 80
      %v1923 = vpop.permute.xlu0 %1922
      %1924 = vrot.lane.b32.xlu0 %v1507, 80
      %v1925 = vpop.permute.xlu0 %1924
      %1926 = vrot.lane.b32.xlu0 %v1510, 80
      %v1927 = vpop.permute.xlu0 %1926
      %1928 = vrot.lane.b32.xlu0 %v1513, 80
      %v1929 = vpop.permute.xlu0 %1928
      %1930 = vrot.lane.b32.xlu0 %v1516, 80
      %v1931 = vpop.permute.xlu0 %1930
      %1932 = vrot.lane.b32.xlu0 %v1519, 80
      %v1933 = vpop.permute.xlu0 %1932
      %1934 = vrot.lane.b32.xlu0 %v1522, 80
      %v1935 = vpop.permute.xlu0 %1934
      %1936 = vrot.lane.b32.xlu0 %v1525, 80
      %v1937 = vpop.permute.xlu0 %1936
      %1938 = vrot.lane.b32.xlu0 %v1528, 80
      %v1939 = vpop.permute.xlu0 %1938
      %1940 = vrot.lane.b32.xlu0 %v1478, 80
      %v1941 = vpop.permute.xlu0 %1940
      %1942 = vrot.lane.b32.xlu0 %v1479, 80
      %v1943 = vpop.permute.xlu0 %1942
      %1944 = vrot.lane.b32.xlu0 %v1480, 80
      %v1945 = vpop.permute.xlu0 %1944
      %1946 = vrot.lane.b32.xlu0 %v1477, 80
      %v1947 = vpop.permute.xlu0 %1946
      %vm1948 = vcmask 654336
      %v1949 = vsel %vm1948, %v1909, %v1911
      %v1950 = vsel %vm1948, %v1911, %v1913
      %v1951 = vsel %vm1948, %v1913, %v1915
      %v1952 = vsel %vm1948, %v1917, %v1919
      %v1953 = vsel %vm1948, %v1919, %v1921
      %v1954 = vsel %vm1948, %v1921, %v1923
      %v1955 = vsel %vm1948, %v1925, %v1927
      %v1956 = vsel %vm1948, %v1927, %v1929
      %v1957 = vsel %vm1948, %v1929, %v1931
      %v1958 = vsel %vm1948, %v1933, %v1935
      %v1959 = vsel %vm1948, %v1935, %v1937
      %v1960 = vsel %vm1948, %v1937, %v1939
      %v1961 = vsel %vm1948, %v1941, %v1943
      %v1962 = vsel %vm1948, %v1943, %v1945
      %v1963 = vsel %vm1948, %v1945, %v1947
      %v1977 = vsel %vm471, %v1907, 0
      %v1980 = vsel %vm316, %v1961, 0
      %v1983 = vsel %vm316, %v1962, 0
      %v1986 = vsel %vm316, %v1963, 0
      %1988 = vmatprep.subr.bf16.mxu0 0
      %1989 = vmatpush1.bf16.msra.mxu0 0
      %1990 = vmatprep.subr.bf16.mxu0 0
      %1991 = vmatpush1.bf16.msra.mxu0 0
      %1992 = vmatprep.subr.bf16.mxu0 0
      %1993 = vmatpush1.bf16.msra.mxu0 0
      %1994 = vmatprep.subr.bf16.mxu0 %v1983
      %1995 = vmatpush1.bf16.msra.mxu0 %v1980
      %1996 = vmatprep.subr.bf16.mxu0 %v1959
      %1997 = vmatpush1.bf16.msra.mxu0 %v1958
      %1998 = vmatprep.subr.bf16.mxu0 %v1956
      %1999 = vmatpush1.bf16.msra.mxu0 %v1955
      %2000 = vmatprep.subr.bf16.mxu0 %v1953
      %2001 = vmatpush1.bf16.msra.mxu0 %v1952
      %2002 = vmatprep.subr.bf16.mxu0 %v1950
      %2003 = vmatpush1.bf16.msra.mxu0 %v1949
      %2004 = vmatprep.subr.bf16.mxu0 0
      %2005 = vmatpush2.bf16.msra.mxu0 0
      %2006 = vmatprep.subr.bf16.mxu0 0
      %2007 = vmatpush2.bf16.msra.mxu0 0
      %2008 = vmatprep.subr.bf16.mxu0 0
      %2009 = vmatpush2.bf16.msra.mxu0 0
      %2010 = vmatprep.subr.bf16.mxu0 0
      %2011 = vmatpush2.bf16.msra.mxu0 0
      %2012 = vmatprep.subr.bf16.mxu0 0
      %2013 = vmatpush2.bf16.msra.mxu0 0
      %2014 = vmatprep.subr.bf16.mxu0 0
      %2015 = vmatpush2.bf16.msra.mxu0 0
      %2016 = vmatprep.subr.bf16.mxu0 0
      %2017 = vmatpush2.bf16.msra.mxu0 0
      %2018 = vmatprep.subr.bf16.mxu0 0
      %2019 = vmatpush2.bf16.msra.mxu0 0
      %2020 = vmatprep.mubr.bf16.mxu0 0
      %2021 = vmatmul.mubr.bf16.gmra.mxu0 %v1977
      %v2022 = vpop.f32.mrf.mxu0
      %v2023 = vadd.f32 0.0, %v2022
      %v2024 = vpop.f32.mrf.mxu0
      %v2025 = vadd.f32 0.0, %v2024
      %v2026 = vpop.f32.mrf.mxu0
      %v2027 = vadd.f32 0.0, %v2026
      %v2028 = vpop.f32.mrf.mxu0
      %v2029 = vadd.f32 0.0, %v2028
      %2030 = vdwg.mxu0
      %2031 = vmatprep.subr.bf16.mxu0 0
      %2032 = vmatpush1.bf16.msra.mxu0 0
      %2033 = vmatprep.subr.bf16.mxu0 0
      %2034 = vmatpush1.bf16.msra.mxu0 0
      %2035 = vmatprep.subr.bf16.mxu0 0
      %2036 = vmatpush1.bf16.msra.mxu0 0
      %2037 = vmatprep.subr.bf16.mxu0 0
      %2038 = vmatpush1.bf16.msra.mxu0 %v1986
      %2039 = vmatprep.subr.bf16.mxu0 0
      %2040 = vmatpush1.bf16.msra.mxu0 %v1960
      %2041 = vmatprep.subr.bf16.mxu0 0
      %2042 = vmatpush1.bf16.msra.mxu0 %v1957
      %2043 = vmatprep.subr.bf16.mxu0 0
      %2044 = vmatpush1.bf16.msra.mxu0 %v1954
      %2045 = vmatprep.subr.bf16.mxu0 0
      %2046 = vmatpush1.bf16.msra.mxu0 %v1951
      %2047 = vmatprep.subr.bf16.mxu0 0
      %2048 = vmatpush2.bf16.msra.mxu0 0
      %2049 = vmatprep.subr.bf16.mxu0 0
      %2050 = vmatpush2.bf16.msra.mxu0 0
      %2051 = vmatprep.subr.bf16.mxu0 0
      %2052 = vmatpush2.bf16.msra.mxu0 0
      %2053 = vmatprep.subr.bf16.mxu0 0
      %2054 = vmatpush2.bf16.msra.mxu0 0
      %2055 = vmatprep.subr.bf16.mxu0 0
      %2056 = vmatpush2.bf16.msra.mxu0 0
      %2057 = vmatprep.subr.bf16.mxu0 0
      %2058 = vmatpush2.bf16.msra.mxu0 0
      %2059 = vmatprep.subr.bf16.mxu0 0
      %2060 = vmatpush2.bf16.msra.mxu0 0
      %2061 = vmatprep.subr.bf16.mxu0 0
      %2062 = vmatpush2.bf16.msra.mxu0 0
      %2063 = vmatprep.mubr.bf16.mxu0 0
      %2064 = vmatmul.mubr.bf16.gmra.mxu0 %v1977
      %v2065 = vpop.f32.mrf.mxu0
      %v2066 = vadd.f32 0.0, %v2065
      %v2067 = vpop.f32.mrf.mxu0
      %v2068 = vpop.f32.mrf.mxu0
      %v2069 = vadd.f32 0.0, %v2068
      %v2070 = vpop.f32.mrf.mxu0
      %2071 = vdwg.mxu0
      %v2072 = vadd.f32 %v1894, %v2023
      %v2073 = vadd.f32 %v1895, %v2025
      %v2074 = vadd.f32 %v1896, %v2066
      %v2075 = vadd.f32 %v1897, %v2027
      %v2076 = vadd.f32 %v1898, %v2029
      %v2077 = vadd.f32 %v1899, %v2069
      %v2078 = vld [vmem:[%s2] sm:$0xff]
      %v2079 = vld [vmem:[%s2 + $0x8] sm:$0xff]
      %2081 = vset.pattern.permute.xlu0 0
      %2082 = vperm.xlu0 %2081, %v2078
      %v2083 = vpop.permute.xlu0 %2082
      %2086 = vset.pattern.permute.xlu0 0
      %2087 = vperm.xlu0 %2086, %v2079
      %v2088 = vpop.permute.xlu0 %2087
      %v2090 = vadd.f32 %v2072, %v2083
      %v2091 = vadd.f32 %v2073, %v2083
      %v2092 = vadd.f32 %v2074, %v2083
      %v2093 = vadd.f32 %v2075, %v2088
      %v2094 = vadd.f32 %v2076, %v2088
      %v2095 = vadd.f32 %v2077, %v2088
      %v2096 = vmax.f32 %v2090, 0.0
      %v2097 = vmax.f32 %v2091, 0.0
      %v2098 = vmax.f32 %v2092, 0.0
      %v2099 = vmax.f32 %v2093, 0.0
      %v2100 = vmax.f32 %v2094, 0.0
      %v2101 = vmax.f32 %v2095, 0.0
      %v2102 = vpack.c.bf16 %v2099, %v2096
      %v2103 = vpack.c.bf16 %v2100, %v2097
      %v2104 = vpack.c.bf16 %v2101, %v2098
      %v2108 = vunpack.c.l.b16 %v2102
      %v2109 = vunpack.c.l.b16 %v2103
      %v2110 = vunpack.c.l.b16 %v2104
      %v2111 = vunpack.c.h.b16 %v2102
      %v2112 = vunpack.c.h.b16 %v2103
      %v2113 = vunpack.c.h.b16 %v2104
      %v2114 = vpack.c.b16 %v2109, %v2108
      %v2115 = vpack.c.b16 %v2110, %v2110
      %v2116 = vpack.c.b16 %v2112, %v2111
      %v2117 = vpack.c.b16 %v2113, %v2113
      %2122 = vst [vmem:[%s206] sm:$0xff] %v2114
      %2123 = vst [vmem:[%s206 + $0x8] sm:$0xf] %v2115
      %2124 = vst [vmem:[%s206 + $0xc] sm:$0xff] %v2116
      %2125 = vst [vmem:[%s206 + $0x14] sm:$0xf] %v2117
      %p2126 = scmp.lt.s32.totalorder %s18, 1
      %s2127 = scalar_select %p2126, %s18, 1
      %p2128 = scmp.lt.s32.totalorder %s19, 0
      %s2129 = scalar_select %p2128, %s19, 0
      %s2130 = smul.addr %s2129, 6
      %s2131 = smul.addr %s2127, 6
      %s2132 = sadd.s32 %s2130, %s2131
      %s2133 = smul.addr %s2132, 4
      %s2134 = scalar_lea.vmem %s3, %s2133
      // Predicated region
      $region33: #{multi_scale_block.1} parent=31 // pred_check
        %p2135 = pneg %p116
      $region34: #{multi_scale_block.1} parent=31 // pred_check_branch
        %2137 = sbr.rel (%p2135) target = $region36
      $region35: #{multi_scale_block.1} parent=31 // pred_region
        _
      $region36: #{multi_scale_block.1} parent=31 // pred_fallthru
        _
    $region32: #{multi_scale_block.1} parent=5 // pred_fallthru
      _
    %p2138 = scmp.le.s32.totalorder 2, %s9
    // Predicated region
    $region37: #{multi_scale_block.1} parent=5 // pred_check
      %p2139 = pneg %p2138
    $region38: #{multi_scale_block.1} parent=5 // pred_check_branch
      %2141 = sbr.rel (%p2139) target = $region40
    $region39: #{multi_scale_block.1} parent=5 // pred_region
      %s2142 = ssub.s32 %s9, 2
      // Predicated region
      $region41: #{multi_scale_block.1} parent=39 // pred_check
        %p2143 = pneg %p122
      $region42: #{multi_scale_block.1} parent=39 // pred_check_branch
        %2145 = sbr.rel (%p2143) target = $region44
      $region43: #{multi_scale_block.1} parent=39 // pred_region
        %p2146 = scmp.lt.s32.totalorder %s20, 1
        %s2147 = scalar_select %p2146, %s20, 1
        %p2148 = scmp.lt.s32.totalorder %s21, 0
        %s2149 = scalar_select %p2148, %s21, 0
        %s2150 = smul.addr %s2149, 6
        %s2151 = smul.addr %s2147, 6
        %s2152 = sadd.s32 %s2150, %s2151
        %s2153 = smul.addr %s2152, 4
        %s2154 = scalar_lea.vmem %s3, %s2153
      $region44: #{multi_scale_block.1} parent=39 // pred_fallthru
        _
    $region40: #{multi_scale_block.1} parent=5 // pred_fallthru
      _
  $region6: #{multi_scale_block.1} parent=0 // loop_footer
    %s13 = sadd.s32 1, %s9
  $region7: #{multi_scale_block.1} parent=0 // loop_footer_branch
    %8 = sbr.rel target = $region3
  $region8: #{multi_scale_block.1} parent=0 // loop_exit
    _

</llo_original>
